<compile_context>
chip_gen: v7x
topology: tpu7x:2x2x1
jax: 0.10.0
libtpu: 0.0.40
codegen_flags: <defaults>
</compile_context>

<pallas_src>
import functools

import jax
import jax.numpy as jnp
from jax.experimental import pallas as pl
from jax.experimental.pallas import tpu as pltpu

LEAK = 0.2                       # LeakyReLU negative slope
EPS = 1e-5                       # BatchNorm2d eps
VMEM_LIMIT = 32 * 1024 * 1024    # explicit scoped-VMEM cap (safe on v5e/v6e/v7x)


def _leaky(x):
    return jnp.where(x >= 0, x, LEAK * x)


def _features(x_bf16, w1, b1, w2):
    """conv1(1x1)+bias -> LeakyReLU -> conv2(1x1).  (C_in, T) bf16 -> (2*ndf, T) f32.

    Matmul precision is deliberately the TPU default (bf16 MXU operands with
    f32 accumulation) -- identical to what the reference f32 einsums do at
    default precision, which is what makes streaming x as bf16 ~free in
    accuracy terms while halving the HBM read.
    """
    x = x_bf16.astype(jnp.float32)
    h1 = _leaky(jnp.dot(w1, x, preferred_element_type=jnp.float32) + b1)
    return jnp.dot(w2, h1, preferred_element_type=jnp.float32)


def _make_stats_kernel(hw_valid, tile, n_inner, needs_mask):
    """Pass 1: accumulate per-channel sum / sum-of-squares of h2 over pixel tiles.

    The partial-sum output block is resident across the inner tile axis (its
    index_map is constant in it), so we accumulate directly into the output --
    no VMEM scratch and no final copy.  Padded tail pixels are masked out.
    """

    def kernel(x_ref, w1_ref, b1_ref, w2_ref, s_ref, sq_ref):
        i = pl.program_id(2)

        @pl.when(i == 0)
        def _():
            s_ref[...] = jnp.zeros_like(s_ref)
            sq_ref[...] = jnp.zeros_like(sq_ref)

        h2 = _features(x_ref[0], w1_ref[...], b1_ref[...], w2_ref[...])   # (c2, T)
        if needs_mask:
            base = (pl.program_id(1) * n_inner + i) * tile
            lane = jax.lax.broadcasted_iota(jnp.int32, (1, tile), 1)
            h2 = jnp.where(base + lane < hw_valid, h2, 0.0)
        s_ref[...] += jnp.sum(h2, axis=1, keepdims=True)[None, None]      # (1,1,c2,1)
        sq_ref[...] += jnp.sum(h2 * h2, axis=1, keepdims=True)[None, None]

    return kernel


def _fwd_kernel(x_ref, w1_ref, b1_ref, w2_ref, scale_ref, shift_ref, w3_ref, o_ref):
    """Pass 2: features -> folded BatchNorm (scale/shift) -> LeakyReLU -> conv3."""
    h2 = _features(x_ref[0], w1_ref[...], b1_ref[...], w2_ref[...])       # (c2, T)
    h3 = _leaky(h2 * scale_ref[...] + shift_ref[...])                     # (c2, T)
    o_ref[0] = jnp.dot(w3_ref[...], h3, preferred_element_type=jnp.float32)  # (1, T)


def _pick_tile(hw_pad, c_in, ndf, c2, budget_bytes=12 * 1024 * 1024, cap=16384):
    """Largest lane-aligned pixel tile that fits the per-step VMEM budget.

    Counts the double-buffered bf16 x block, the double-buffered f32 output
    block, and the live f32 intermediates h1/h2/h3 of pass 2 (the bigger pass).
    hw_pad is always a multiple of 128, so T=128 is a guaranteed fallback.
    """
    per_px = 2 * c_in * 2 + 2 * 4 + (ndf + 2 * c2) * 4
    t = min(cap, budget_bytes // per_px, hw_pad)
    t = max(128, (t // 128) * 128)
    while hw_pad % t:
        t -= 128
    return t


def init_params(key, input_nc, ndf):
    """Parameter init.  Conv2d (out,in,1,1) weights are stored as (out,in)."""
    k1, k2, k3, kb = jax.random.split(key, 4)
    w1 = 0.1 * jax.random.normal(k1, (ndf, input_nc), jnp.float32)
    b1 = 0.1 * jax.random.normal(kb, (ndf, 1), jnp.float32)
    w2 = 0.1 * jax.random.normal(k2, (2 * ndf, ndf), jnp.float32)       # bias=False
    gamma = jnp.ones((2 * ndf,), jnp.float32)                           # BN affine
    beta = jnp.zeros((2 * ndf,), jnp.float32)
    w3 = 0.1 * jax.random.normal(k3, (1, 2 * ndf), jnp.float32)         # bias=False
    return (w1, b1, w2, gamma, beta, w3)


def pixel_discriminator(x_nchw, params, tile_hw=None):
    w1, b1, w2, gamma, beta, w3 = params
    N, C, H, W = x_nchw.shape
    HW = H * W
    M = N * HW                                    # count of *valid* pixels for BN
    ndf, c2 = w1.shape[0], w2.shape[0]

    # pixels-on-lanes: view as (N, C, H*W); pad the pixel axis to a multiple of
    # 128 so every tile (and the output store) stays lane-dense / unmasked.
    hw_pad = ((HW + 127) // 128) * 128
    pad = hw_pad - HW
    x3d = x_nchw.reshape(N, C, HW).astype(jnp.bfloat16)   # bf16 stream: halves the
    if pad:                                               # HBM read paid by both passes
        x3d = jnp.pad(x3d, ((0, 0), (0, 0), (0, pad)))

    T = tile_hw if tile_hw is not None else _pick_tile(hw_pad, C, ndf, c2)
    assert hw_pad % T == 0 and T % 128 == 0
    n_tiles = hw_pad // T

    # v7x megacore: with a single image the N axis cannot shard across the two
    # TensorCores, so split the pixel-tile axis into (parallel outer, arbitrary
    # inner) and emit per-outer partial sums (reduced in the wrapper).
    n_outer = 2 if (N == 1 and n_tiles % 2 == 0) else 1
    n_inner = n_tiles // n_outer

    # ---------------- pass 1: BatchNorm statistics (sum, sum-of-squares) -------
    x_spec1 = pl.BlockSpec((1, C, T), lambda n, o, i: (n, 0, o * n_inner + i))
    w1_spec1 = pl.BlockSpec((ndf, C), lambda n, o, i: (0, 0))
    b1_spec1 = pl.BlockSpec((ndf, 1), lambda n, o, i: (0, 0))
    w2_spec1 = pl.BlockSpec((c2, ndf), lambda n, o, i: (0, 0))
    stat_spec = pl.BlockSpec((1, 1, c2, 1), lambda n, o, i: (n, o, 0, 0))

    s_part, sq_part = pl.pallas_call(
        _make_stats_kernel(HW, T, n_inner, pad > 0),
        out_shape=(jax.ShapeDtypeStruct((N, n_outer, c2, 1), jnp.float32),
                   jax.ShapeDtypeStruct((N, n_outer, c2, 1), jnp.float32)),
        grid_spec=pltpu.PrefetchScalarGridSpec(
            num_scalar_prefetch=0,
            grid=(N, n_outer, n_inner),
            in_specs=[x_spec1, w1_spec1, b1_spec1, w2_spec1],
            out_specs=(stat_spec, stat_spec)),
        compiler_params=pltpu.CompilerParams(
            dimension_semantics=("parallel", "parallel", "arbitrary"),
            vmem_limit_bytes=VMEM_LIMIT),
        cost_estimate=pl.CostEstimate(
            flops=2 * N * hw_pad * (C * ndf + ndf * c2) + 4 * N * hw_pad * c2,
            transcendentals=0,
            bytes_accessed=2 * x3d.size
            + 4 * (2 * N * n_outer * c2 + w1.size + b1.size + w2.size)),
    )(x3d, w1, b1, w2)

    # Fold BN (training-mode batch stats, biased variance) into scale/shift.
    total = jnp.sum(s_part, axis=(0, 1))[:, 0]       # (c2,)
    total_sq = jnp.sum(sq_part, axis=(0, 1))[:, 0]   # (c2,)
    mean = total / M
    var = total_sq / M - mean * mean
    inv = jax.lax.rsqrt(var + EPS)
    scale = (gamma * inv).reshape(c2, 1)
    shift = (beta - gamma * inv * mean).reshape(c2, 1)

    # ---------------- pass 2: normalize + LeakyReLU + conv3 --------------------
    x_spec2 = pl.BlockSpec((1, C, T), lambda n, t: (n, 0, t))
    out3d = pl.pallas_call(
        _fwd_kernel,
        out_shape=jax.ShapeDtypeStruct((N, 1, hw_pad), jnp.float32),
        grid_spec=pltpu.PrefetchScalarGridSpec(
            num_scalar_prefetch=0,
            grid=(N, n_tiles),
            in_specs=[x_spec2,
                      pl.BlockSpec((ndf, C), lambda n, t: (0, 0)),
                      pl.BlockSpec((ndf, 1), lambda n, t: (0, 0)),
                      pl.BlockSpec((c2, ndf), lambda n, t: (0, 0)),
                      pl.BlockSpec((c2, 1), lambda n, t: (0, 0)),
                      pl.BlockSpec((c2, 1), lambda n, t: (0, 0)),
                      pl.BlockSpec((1, c2), lambda n, t: (0, 0))],
            out_specs=pl.BlockSpec((1, 1, T), lambda n, t: (n, 0, t))),
        compiler_params=pltpu.CompilerParams(
            dimension_semantics=("parallel", "parallel"),
            vmem_limit_bytes=VMEM_LIMIT),
        cost_estimate=pl.CostEstimate(
            flops=2 * N * hw_pad * (C * ndf + ndf * c2 + c2) + 4 * N * hw_pad * c2,
            transcendentals=0,
            bytes_accessed=2 * x3d.size + 4 * (N * hw_pad + w1.size + b1.size
                                               + w2.size + 2 * c2 + w3.size)),
    )(x3d, w1, b1, w2, scale, shift, w3)

    # Padded tail pixels are dropped here; output stays lane-dense in-kernel.
    return out3d[:, :, :HW].reshape(N, 1, H, W)


def reference_forward(x_nchw, params):
    """Pure-JAX reference (same math as the PyTorch module in training mode)."""
    w1, b1, w2, gamma, beta, w3 = params
    N, C, H, W = x_nchw.shape
    xf = x_nchw.reshape(N, C, H * W).astype(jnp.float32)
    h1 = _leaky(jnp.einsum("oc,ncm->nom", w1, xf) + b1[None])
    h2 = jnp.einsum("oc,ncm->nom", w2, h1)
    mean = jnp.mean(h2, axis=(0, 2), keepdims=True)
    var = jnp.mean((h2 - mean) ** 2, axis=(0, 2), keepdims=True)   # biased var
    h3 = _leaky((h2 - mean) * jax.lax.rsqrt(var + EPS) * gamma[None, :, None]
                + beta[None, :, None])
    out = jnp.einsum("oc,ncm->nom", w3, h3)
    return out.reshape(N, 1, H, W)


if __name__ == "__main__":
    key = jax.random.PRNGKey(0)
    k_x, k_p, k_x2, k_p2 = jax.random.split(key, 4)

    # Case 1: N=2, input_nc=4, 16x16, ndf=8.  tile_hw=128 forces a 2-tile grid
    # per image, exercising the resident-output stats accumulation and the
    # lane-dense tiled output path.
    N, input_nc, H, W, ndf = 2, 4, 16, 16, 8
    x = jax.random.normal(k_x, (N, input_nc, H, W), jnp.float32)
    params = init_params(k_p, input_nc, ndf)

    fwd = jax.jit(functools.partial(pixel_discriminator, tile_hw=128))
    out = jax.block_until_ready(fwd(x, params))
    assert out.shape == (N, 1, H, W)

    # Tight check: same bf16-quantized input through the f32 reference (both
    # paths then use default-precision matmuls).
    x_q = x.astype(jnp.bfloat16).astype(jnp.float32)
    ref_q = reference_forward(x_q, params)
    assert jnp.allclose(out, ref_q, atol=5e-3, rtol=5e-3), float(
        jnp.max(jnp.abs(out - ref_q)))
    # Sanity vs the full-f32 module: bf16 x streaming drift stays small.
    ref = reference_forward(x, params)
    assert jnp.allclose(out, ref, atol=5e-2, rtol=5e-2), float(
        jnp.max(jnp.abs(out - ref)))

    # Case 2: N=1, 20x20 (HW=400 -> padded to 512) -- exercises the pixel-axis
    # padding mask in the stats pass and the v7x outer/inner tile split.
    N2, C2_in, H2, W2, ndf2 = 1, 3, 20, 20, 8
    x2 = jax.random.normal(k_x2, (N2, C2_in, H2, W2), jnp.float32)
    params2 = init_params(k_p2, C2_in, ndf2)
    out2 = jax.block_until_ready(
        jax.jit(functools.partial(pixel_discriminator, tile_hw=128))(x2, params2))
    ref2 = reference_forward(x2.astype(jnp.bfloat16).astype(jnp.float32), params2)
    assert out2.shape == (N2, 1, H2, W2)
    assert jnp.allclose(out2, ref2, atol=5e-3, rtol=5e-3), float(
        jnp.max(jnp.abs(out2 - ref2)))

    print("KERNEL_OK")
</pallas_src>

<mosaic_0001>
module attributes {stable_mosaic.version = 11 : i64} {
  func.func @kernel(%arg0: i32, %arg1: i32, %arg2: i32, %arg3: memref<1x4x128xbf16, #tpu.memory_space<vmem>>, %arg4: memref<8x4xf32, #tpu.memory_space<vmem>>, %arg5: memref<8x1xf32, #tpu.memory_space<vmem>>, %arg6: memref<16x8xf32, #tpu.memory_space<vmem>>, %arg7: memref<1x1x16x1xf32, #tpu.memory_space<vmem>>, %arg8: memref<1x1x16x1xf32, #tpu.memory_space<vmem>>) attributes {dimension_semantics = [#tpu.dimension_semantics<parallel>, #tpu.dimension_semantics<parallel>, #tpu.dimension_semantics<arbitrary>], iteration_bounds = array<i64: 2, 1, 2>, scalar_prefetch = 0 : i64, scratch_operands = 0 : i64, tpu.core_type = #tpu.core_type<tc>, window_params = [{transform_indices = @transform_0, window_bounds = array<i64: 1, 4, 128>}, {pipeline_mode = #tpu.pipeline_mode<synchronous>, transform_indices = @transform_1, window_bounds = array<i64: 8, 4>}, {pipeline_mode = #tpu.pipeline_mode<synchronous>, transform_indices = @transform_2, window_bounds = array<i64: 8, 1>}, {pipeline_mode = #tpu.pipeline_mode<synchronous>, transform_indices = @transform_3, window_bounds = array<i64: 16, 8>}, {transform_indices = @transform_4, window_bounds = array<i64: 1, 1, 16, 1>}, {transform_indices = @transform_5, window_bounds = array<i64: 1, 1, 16, 1>}]} {
    %c0_i32 = arith.constant 0 : i32
    %0 = arith.cmpi eq, %arg2, %c0_i32 : i32
    %1 = arith.extui %0 : i1 to i32
    %c0_i32_0 = arith.constant 0 : i32
    %2 = arith.cmpi ne, %1, %c0_i32_0 : i32
    scf.if %2 {
      %cst_30 = arith.constant 0.000000e+00 : f32
      %31 = vector.broadcast %cst_30 : f32 to vector<1x1x16x1xf32>
      %c0_31 = arith.constant 0 : index
      %c0_32 = arith.constant 0 : index
      %c0_33 = arith.constant 0 : index
      %c0_34 = arith.constant 0 : index
      %32 = vector.load %arg7[%c0_31, %c0_32, %c0_33, %c0_34] : memref<1x1x16x1xf32, #tpu.memory_space<vmem>>, vector<1x1x16x1xf32>
      tpu.vector_store %arg7[%c0_31, %c0_32, %c0_33, %c0_34], %31 {strides = array<i32>} : memref<1x1x16x1xf32, #tpu.memory_space<vmem>>, vector<1x1x16x1xf32>,
      %cst_35 = arith.constant 0.000000e+00 : f32
      %33 = vector.broadcast %cst_35 : f32 to vector<1x1x16x1xf32>
      %c0_36 = arith.constant 0 : index
      %c0_37 = arith.constant 0 : index
      %c0_38 = arith.constant 0 : index
      %c0_39 = arith.constant 0 : index
      %34 = vector.load %arg8[%c0_36, %c0_37, %c0_38, %c0_39] : memref<1x1x16x1xf32, #tpu.memory_space<vmem>>, vector<1x1x16x1xf32>
      tpu.vector_store %arg8[%c0_36, %c0_37, %c0_38, %c0_39], %33 {strides = array<i32>} : memref<1x1x16x1xf32, #tpu.memory_space<vmem>>, vector<1x1x16x1xf32>,
    } else {
    }
    %c0 = arith.constant 0 : index
    %c0_1 = arith.constant 0 : index
    %c0_2 = arith.constant 0 : index
    %3 = vector.load %arg3[%c0, %c0_1, %c0_2] : memref<1x4x128xbf16, #tpu.memory_space<vmem>>, vector<1x4x128xbf16>
    %4 = vector.shape_cast %3 : vector<1x4x128xbf16> to vector<4x128xbf16>
    %c0_3 = arith.constant 0 : index
    %c0_4 = arith.constant 0 : index
    %5 = vector.load %arg4[%c0_3, %c0_4] : memref<8x4xf32, #tpu.memory_space<vmem>>, vector<8x4xf32>
    %c0_5 = arith.constant 0 : index
    %c0_6 = arith.constant 0 : index
    %6 = vector.load %arg5[%c0_5, %c0_6] : memref<8x1xf32, #tpu.memory_space<vmem>>, vector<8x1xf32>
    %c0_7 = arith.constant 0 : index
    %c0_8 = arith.constant 0 : index
    %7 = vector.load %arg6[%c0_7, %c0_8] : memref<16x8xf32, #tpu.memory_space<vmem>>, vector<16x8xf32>
    %8 = arith.extf %4 : vector<4x128xbf16> to vector<4x128xf32>
    %cst = arith.constant dense<0.000000e+00> : vector<8x128xf32>
    %9 = tpu.matmul %5, %8, %cst {dimension_numbers = #tpu.dot_dimension_numbers<[1], [0], [0], [1], [0, 0, 1, 1], [], []>} : vector<8x4xf32>, vector<4x128xf32>, vector<8x128xf32> -> vector<8x128xf32>
    %10 = vector.broadcast %6 : vector<8x1xf32> to vector<8x128xf32>
    %11 = arith.addf %9, %10 : vector<8x128xf32>
    %cst_9 = arith.constant 0.000000e+00 : f32
    %12 = vector.broadcast %cst_9 : f32 to vector<8x128xf32>
    %13 = arith.cmpf oge, %11, %12 : vector<8x128xf32>
    %cst_10 = arith.constant 2.000000e-01 : f32
    %14 = vector.broadcast %cst_10 : f32 to vector<8x128xf32>
    %15 = arith.mulf %14, %11 : vector<8x128xf32>
    %16 = arith.select %13, %11, %15 : vector<8x128xi1>, vector<8x128xf32>
    %cst_11 = arith.constant dense<0.000000e+00> : vector<16x128xf32>
    %17 = tpu.matmul %7, %16, %cst_11 {dimension_numbers = #tpu.dot_dimension_numbers<[1], [0], [0], [1], [0, 0, 1, 1], [], []>} : vector<16x8xf32>, vector<8x128xf32>, vector<16x128xf32> -> vector<16x128xf32>
    %c0_12 = arith.constant 0 : index
    %c0_13 = arith.constant 0 : index
    %c0_14 = arith.constant 0 : index
    %c0_15 = arith.constant 0 : index
    %18 = vector.load %arg7[%c0_12, %c0_13, %c0_14, %c0_15] : memref<1x1x16x1xf32, #tpu.memory_space<vmem>>, vector<1x1x16x1xf32>
    %cst_16 = arith.constant dense<0.000000e+00> : vector<16xf32>
    %19 = vector.multi_reduction <add>, %17, %cst_16 [1] : vector<16x128xf32> to vector<16xf32>
    %20 = vector.shape_cast %19 : vector<16xf32> to vector<16x1xf32>
    %21 = vector.shape_cast %20 : vector<16x1xf32> to vector<1x1x16x1xf32>
    %22 = arith.addf %18, %21 : vector<1x1x16x1xf32>
    %c0_17 = arith.constant 0 : index
    %c0_18 = arith.constant 0 : index
    %c0_19 = arith.constant 0 : index
    %c0_20 = arith.constant 0 : index
    %23 = vector.load %arg7[%c0_17, %c0_18, %c0_19, %c0_20] : memref<1x1x16x1xf32, #tpu.memory_space<vmem>>, vector<1x1x16x1xf32>
    tpu.vector_store %arg7[%c0_17, %c0_18, %c0_19, %c0_20], %22 {strides = array<i32>} : memref<1x1x16x1xf32, #tpu.memory_space<vmem>>, vector<1x1x16x1xf32>,
    %c0_21 = arith.constant 0 : index
    %c0_22 = arith.constant 0 : index
    %c0_23 = arith.constant 0 : index
    %c0_24 = arith.constant 0 : index
    %24 = vector.load %arg8[%c0_21, %c0_22, %c0_23, %c0_24] : memref<1x1x16x1xf32, #tpu.memory_space<vmem>>, vector<1x1x16x1xf32>
    %25 = arith.mulf %17, %17 : vector<16x128xf32>
    %cst_25 = arith.constant dense<0.000000e+00> : vector<16xf32>
    %26 = vector.multi_reduction <add>, %25, %cst_25 [1] : vector<16x128xf32> to vector<16xf32>
    %27 = vector.shape_cast %26 : vector<16xf32> to vector<16x1xf32>
    %28 = vector.shape_cast %27 : vector<16x1xf32> to vector<1x1x16x1xf32>
    %29 = arith.addf %24, %28 : vector<1x1x16x1xf32>
    %c0_26 = arith.constant 0 : index
    %c0_27 = arith.constant 0 : index
    %c0_28 = arith.constant 0 : index
    %c0_29 = arith.constant 0 : index
    %30 = vector.load %arg8[%c0_26, %c0_27, %c0_28, %c0_29] : memref<1x1x16x1xf32, #tpu.memory_space<vmem>>, vector<1x1x16x1xf32>
    tpu.vector_store %arg8[%c0_26, %c0_27, %c0_28, %c0_29], %29 {strides = array<i32>} : memref<1x1x16x1xf32, #tpu.memory_space<vmem>>, vector<1x1x16x1xf32>,
    return
  }
  func.func @transform_0(%arg0: i32, %arg1: i32, %arg2: i32) -> (i32, i32, i32) {
    %c2_i32 = arith.constant 2 : i32
    %0 = arith.muli %arg1, %c2_i32 : i32
    %1 = arith.addi %0, %arg2 : i32
    %c0_i32 = arith.constant 0 : i32
    %c0_i32_0 = arith.constant 0 : i32
    return %arg0, %c0_i32, %1 : i32, i32, i32
  }
  func.func @transform_1(%arg0: i32, %arg1: i32, %arg2: i32) -> (i32, i32) {
    %c0_i32 = arith.constant 0 : i32
    %c0_i32_0 = arith.constant 0 : i32
    %c0_i32_1 = arith.constant 0 : i32
    return %c0_i32, %c0_i32_0 : i32, i32
  }
  func.func @transform_2(%arg0: i32, %arg1: i32, %arg2: i32) -> (i32, i32) {
    %c0_i32 = arith.constant 0 : i32
    %c0_i32_0 = arith.constant 0 : i32
    %c0_i32_1 = arith.constant 0 : i32
    return %c0_i32, %c0_i32_0 : i32, i32
  }
  func.func @transform_3(%arg0: i32, %arg1: i32, %arg2: i32) -> (i32, i32) {
    %c0_i32 = arith.constant 0 : i32
    %c0_i32_0 = arith.constant 0 : i32
    %c0_i32_1 = arith.constant 0 : i32
    return %c0_i32, %c0_i32_0 : i32, i32
  }
  func.func @transform_4(%arg0: i32, %arg1: i32, %arg2: i32) -> (i32, i32, i32, i32) {
    %c0_i32 = arith.constant 0 : i32
    %c0_i32_0 = arith.constant 0 : i32
    %c0_i32_1 = arith.constant 0 : i32
    return %arg0, %arg1, %c0_i32, %c0_i32_0 : i32, i32, i32, i32
  }
  func.func @transform_5(%arg0: i32, %arg1: i32, %arg2: i32) -> (i32, i32, i32, i32) {
    %c0_i32 = arith.constant 0 : i32
    %c0_i32_0 = arith.constant 0 : i32
    %c0_i32_1 = arith.constant 0 : i32
    return %arg0, %arg1, %c0_i32, %c0_i32_0 : i32, i32, i32, i32
  }
}

module attributes {stable_mosaic.version = 11 : i64} {
  func.func @_fwd_kernel(%arg0: i32, %arg1: i32, %arg2: memref<1x4x128xbf16, #tpu.memory_space<vmem>>, %arg3: memref<8x4xf32, #tpu.memory_space<vmem>>, %arg4: memref<8x1xf32, #tpu.memory_space<vmem>>, %arg5: memref<16x8xf32, #tpu.memory_space<vmem>>, %arg6: memref<16x1xf32, #tpu.memory_space<vmem>>, %arg7: memref<16x1xf32, #tpu.memory_space<vmem>>, %arg8: memref<1x16xf32, #tpu.memory_space<vmem>>, %arg9: memref<1x1x128xf32, #tpu.memory_space<vmem>>) attributes {dimension_semantics = [#tpu.dimension_semantics<parallel>, #tpu.dimension_semantics<parallel>], iteration_bounds = array<i64: 2, 2>, scalar_prefetch = 0 : i64, scratch_operands = 0 : i64, tpu.core_type = #tpu.core_type<tc>, window_params = [{transform_indices = @transform_0, window_bounds = array<i64: 1, 4, 128>}, {pipeline_mode = #tpu.pipeline_mode<synchronous>, transform_indices = @transform_1, window_bounds = array<i64: 8, 4>}, {pipeline_mode = #tpu.pipeline_mode<synchronous>, transform_indices = @transform_2, window_bounds = array<i64: 8, 1>}, {pipeline_mode = #tpu.pipeline_mode<synchronous>, transform_indices = @transform_3, window_bounds = array<i64: 16, 8>}, {pipeline_mode = #tpu.pipeline_mode<synchronous>, transform_indices = @transform_4, window_bounds = array<i64: 16, 1>}, {pipeline_mode = #tpu.pipeline_mode<synchronous>, transform_indices = @transform_5, window_bounds = array<i64: 16, 1>}, {pipeline_mode = #tpu.pipeline_mode<synchronous>, transform_indices = @transform_6, window_bounds = array<i64: 1, 16>}, {transform_indices = @transform_7, window_bounds = array<i64: 1, 1, 128>}]} {
    %c0 = arith.constant 0 : index
    %c0_0 = arith.constant 0 : index
    %c0_1 = arith.constant 0 : index
    %0 = vector.load %arg2[%c0, %c0_0, %c0_1] : memref<1x4x128xbf16, #tpu.memory_space<vmem>>, vector<1x4x128xbf16>
    %1 = vector.shape_cast %0 : vector<1x4x128xbf16> to vector<4x128xbf16>
    %c0_2 = arith.constant 0 : index
    %c0_3 = arith.constant 0 : index
    %2 = vector.load %arg3[%c0_2, %c0_3] : memref<8x4xf32, #tpu.memory_space<vmem>>, vector<8x4xf32>
    %c0_4 = arith.constant 0 : index
    %c0_5 = arith.constant 0 : index
    %3 = vector.load %arg4[%c0_4, %c0_5] : memref<8x1xf32, #tpu.memory_space<vmem>>, vector<8x1xf32>
    %c0_6 = arith.constant 0 : index
    %c0_7 = arith.constant 0 : index
    %4 = vector.load %arg5[%c0_6, %c0_7] : memref<16x8xf32, #tpu.memory_space<vmem>>, vector<16x8xf32>
    %5 = arith.extf %1 : vector<4x128xbf16> to vector<4x128xf32>
    %cst = arith.constant dense<0.000000e+00> : vector<8x128xf32>
    %6 = tpu.matmul %2, %5, %cst {dimension_numbers = #tpu.dot_dimension_numbers<[1], [0], [0], [1], [0, 0, 1, 1], [], []>} : vector<8x4xf32>, vector<4x128xf32>, vector<8x128xf32> -> vector<8x128xf32>
    %7 = vector.broadcast %3 : vector<8x1xf32> to vector<8x128xf32>
    %8 = arith.addf %6, %7 : vector<8x128xf32>
    %cst_8 = arith.constant 0.000000e+00 : f32
    %9 = vector.broadcast %cst_8 : f32 to vector<8x128xf32>
    %10 = arith.cmpf oge, %8, %9 : vector<8x128xf32>
    %cst_9 = arith.constant 2.000000e-01 : f32
    %11 = vector.broadcast %cst_9 : f32 to vector<8x128xf32>
    %12 = arith.mulf %11, %8 : vector<8x128xf32>
    %13 = arith.select %10, %8, %12 : vector<8x128xi1>, vector<8x128xf32>
    %cst_10 = arith.constant dense<0.000000e+00> : vector<16x128xf32>
    %14 = tpu.matmul %4, %13, %cst_10 {dimension_numbers = #tpu.dot_dimension_numbers<[1], [0], [0], [1], [0, 0, 1, 1], [], []>} : vector<16x8xf32>, vector<8x128xf32>, vector<16x128xf32> -> vector<16x128xf32>
    %c0_11 = arith.constant 0 : index
    %c0_12 = arith.constant 0 : index
    %15 = vector.load %arg6[%c0_11, %c0_12] : memref<16x1xf32, #tpu.memory_space<vmem>>, vector<16x1xf32>
    %16 = vector.broadcast %15 : vector<16x1xf32> to vector<16x128xf32>
    %17 = arith.mulf %14, %16 : vector<16x128xf32>
    %c0_13 = arith.constant 0 : index
    %c0_14 = arith.constant 0 : index
    %18 = vector.load %arg7[%c0_13, %c0_14] : memref<16x1xf32, #tpu.memory_space<vmem>>, vector<16x1xf32>
    %19 = vector.broadcast %18 : vector<16x1xf32> to vector<16x128xf32>
    %20 = arith.addf %17, %19 : vector<16x128xf32>
    %cst_15 = arith.constant 0.000000e+00 : f32
    %21 = vector.broadcast %cst_15 : f32 to vector<16x128xf32>
    %22 = arith.cmpf oge, %20, %21 : vector<16x128xf32>
    %cst_16 = arith.constant 2.000000e-01 : f32
    %23 = vector.broadcast %cst_16 : f32 to vector<16x128xf32>
    %24 = arith.mulf %23, %20 : vector<16x128xf32>
    %25 = arith.select %22, %20, %24 : vector<16x128xi1>, vector<16x128xf32>
    %c0_17 = arith.constant 0 : index
    %c0_18 = arith.constant 0 : index
    %26 = vector.load %arg8[%c0_17, %c0_18] : memref<1x16xf32, #tpu.memory_space<vmem>>, vector<1x16xf32>
    %cst_19 = arith.constant dense<0.000000e+00> : vector<1x128xf32>
    %27 = tpu.matmul %26, %25, %cst_19 {dimension_numbers = #tpu.dot_dimension_numbers<[1], [0], [0], [1], [0, 0, 1, 1], [], []>} : vector<1x16xf32>, vector<16x128xf32>, vector<1x128xf32> -> vector<1x128xf32>
    %c0_20 = arith.constant 0 : index
    %c0_21 = arith.constant 0 : index
    %c0_22 = arith.constant 0 : index
    %28 = vector.load %arg9[%c0_20, %c0_21, %c0_22] : memref<1x1x128xf32, #tpu.memory_space<vmem>>, vector<1x1x128xf32>
    %29 = vector.shape_cast %28 : vector<1x1x128xf32> to vector<1x128xf32>
    %30 = vector.shape_cast %27 : vector<1x128xf32> to vector<1x1x128xf32>
    tpu.vector_store %arg9[%c0_20, %c0_21, %c0_22], %30 {strides = array<i32>} : memref<1x1x128xf32, #tpu.memory_space<vmem>>, vector<1x1x128xf32>,
    return
  }
  func.func @transform_0(%arg0: i32, %arg1: i32) -> (i32, i32, i32) {
    %c0_i32 = arith.constant 0 : i32
    %c0_i32_0 = arith.constant 0 : i32
    return %arg0, %c0_i32, %arg1 : i32, i32, i32
  }
  func.func @transform_1(%arg0: i32, %arg1: i32) -> (i32, i32) {
    %c0_i32 = arith.constant 0 : i32
    %c0_i32_0 = arith.constant 0 : i32
    %c0_i32_1 = arith.constant 0 : i32
    return %c0_i32, %c0_i32_0 : i32, i32
  }
  func.func @transform_2(%arg0: i32, %arg1: i32) -> (i32, i32) {
    %c0_i32 = arith.constant 0 : i32
    %c0_i32_0 = arith.constant 0 : i32
    %c0_i32_1 = arith.constant 0 : i32
    return %c0_i32, %c0_i32_0 : i32, i32
  }
  func.func @transform_3(%arg0: i32, %arg1: i32) -> (i32, i32) {
    %c0_i32 = arith.constant 0 : i32
    %c0_i32_0 = arith.constant 0 : i32
    %c0_i32_1 = arith.constant 0 : i32
    return %c0_i32, %c0_i32_0 : i32, i32
  }
  func.func @transform_4(%arg0: i32, %arg1: i32) -> (i32, i32) {
    %c0_i32 = arith.constant 0 : i32
    %c0_i32_0 = arith.constant 0 : i32
    %c0_i32_1 = arith.constant 0 : i32
    return %c0_i32, %c0_i32_0 : i32, i32
  }
  func.func @transform_5(%arg0: i32, %arg1: i32) -> (i32, i32) {
    %c0_i32 = arith.constant 0 : i32
    %c0_i32_0 = arith.constant 0 : i32
    %c0_i32_1 = arith.constant 0 : i32
    return %c0_i32, %c0_i32_0 : i32, i32
  }
  func.func @transform_6(%arg0: i32, %arg1: i32) -> (i32, i32) {
    %c0_i32 = arith.constant 0 : i32
    %c0_i32_0 = arith.constant 0 : i32
    %c0_i32_1 = arith.constant 0 : i32
    return %c0_i32, %c0_i32_0 : i32, i32
  }
  func.func @transform_7(%arg0: i32, %arg1: i32) -> (i32, i32, i32) {
    %c0_i32 = arith.constant 0 : i32
    %c0_i32_0 = arith.constant 0 : i32
    return %arg0, %c0_i32, %arg1 : i32, i32, i32
  }
}

</mosaic_0001>

<llo_original>
// kernel: pixel_discriminator.3
$region0: #{pixel_discriminator.3}
  #allocation0 [shape = 'u32[]', space=smem, size = 0x4, offset = 0x4, fixed_abs, tag = 'smem constant byte address 0x4 - core index']
  #allocation1 [shape = 'u32[144,128]{1,0:T(1,128)}', space=vmem, size = 0x12000, scoped, tag = 'internal scratch']
  %s0 = inlined_call_operand.vmem [shape: bf16[2,4,256], index: 0, kind: input, shape index: {}]
  %s1 = inlined_call_operand.vmem [shape: f32[8,4], index: 1, kind: input, shape index: {}]
  %s2 = inlined_call_operand.vmem [shape: f32[8,1], index: 2, kind: input, shape index: {}]
  %s3 = inlined_call_operand.vmem [shape: f32[16,8], index: 3, kind: input, shape index: {}]
  %s4 = inlined_call_operand.vmem [shape: f32[16,1], index: 4, kind: input, shape index: {}]
  %s5 = inlined_call_operand.vmem [shape: f32[16,1], index: 5, kind: input, shape index: {}]
  %s6 = inlined_call_operand.vmem [shape: f32[1,16], index: 6, kind: input, shape index: {}]
  %s7 = inlined_call_operand.vmem [shape: f32[2,1,256], index: 7, kind: output, shape index: {}]
  %s8 = sld [smem:[#allocation0]]
  $region61: #{pixel_discriminator.3} parent=0
    _
  %s10 = ssub.s32 1, %s8
  %s11 = scalar_select 0, %s10, %s8
  loop: start=0, step=1, limit=6
  $region2: #{pixel_discriminator.3} parent=0 // loop_pre_header
    _
  $region3: #{pixel_discriminator.3} parent=0 // loop_header
    %s13 = sphi 0, %s17
    %p14 = scmp.ge.s32.totalorder %s13, 6
    %s20 = sphi 0, %s32
    %s21 = sphi 0, %s28
    %s22 = sphi 0, %s20
    %s23 = sphi 0, %s21
    %s24 = sphi 0, %s22
    %s25 = sphi 0, %s23
    %s37 = sphi 0, %s39
    %s40 = sphi 0, %s37
    %s41 = sphi 0, %s40
    %s57 = sphi 0, %s41
    %s61 = sphi 0, %s61
    %s63 = sphi 0, %s61
    %s64 = sphi 0, %s63
    %s78 = sphi 0, %s64
    %s82 = sphi 0, %s82
    %s84 = sphi 0, %s82
    %s85 = sphi 0, %s84
    %s99 = sphi 0, %s85
    %s103 = sphi 0, %s103
    %s105 = sphi 0, %s103
    %s106 = sphi 0, %s105
    %s120 = sphi 0, %s106
    %s124 = sphi 0, %s124
    %s126 = sphi 0, %s124
    %s127 = sphi 0, %s126
    %s141 = sphi 0, %s127
    %s145 = sphi 0, %s145
    %s147 = sphi 0, %s145
    %s148 = sphi 0, %s147
    %s162 = sphi 0, %s148
    %s166 = sphi 0, %s166
    %s168 = sphi 0, %s166
    %s169 = sphi 0, %s168
    %s183 = sphi 0, %s169
    %s191 = sphi 0, %s193
    %s194 = sphi 0, %s191
    %s195 = sphi 0, %s194
    %s211 = sphi 0, %s195
  $region4: #{pixel_discriminator.3} parent=0 // loop_header_branch
    %16 = sbr.rel (%p14) target = $region8
  $region5: #{pixel_discriminator.3} parent=0 // loop_body
    %s18 = ssub.s32 %s13, 1
    %s19 = ssub.s32 %s13, 2
    %s26 = sadd.s32 1, %s21
    %p27 = scmp.ge.s32.totalorder %s26, 2
    %s28 = scalar_select %p27, 0, %s26
    %s29 = sadd.s32 1, %s20
    %s30 = scalar_select %p27, %s29, %s20
    %p31 = scmp.ge.s32.totalorder %s30, 2
    %s32 = scalar_select %p31, 0, %s30
    %s33 = ssub.s32 %s20, %s32
    %s34 = ssub.s32 %s21, %s28
    %s35 = sor.u32 %s33, %s34
    %p36 = scmp.eq.s32.totalorder %s35, 0
    %s38 = sadd.s32 %s37, 1
    %s39 = scalar_select %p36, %s37, %s38
    %p42 = pneg %p36
    %p43 = scmp.eq.s32.totalorder %s13, 3
    %p44 = por %p42, %p43
    %p45 = scmp.ne.s32.totalorder %s37, %s40
    %p46 = scmp.eq.s32.totalorder %s13, 0
    %p47 = por %p45, %p46
    %p48 = scmp.ne.s32.totalorder %s37, %s40
    %p49 = scmp.eq.s32.totalorder %s18, 3
    %p50 = por %p48, %p49
    %p51 = scmp.ne.s32.totalorder %s40, %s41
    %p52 = scmp.eq.s32.totalorder %s18, 0
    %p53 = por %p51, %p52
    %p54 = scmp.ne.s32.totalorder %s40, %s41
    %p55 = scmp.eq.s32.totalorder %s19, 3
    %p56 = por %p54, %p55
    %p58 = scmp.ne.s32.totalorder %s41, %s57
    %p59 = scmp.eq.s32.totalorder %s19, 0
    %p60 = por %p58, %p59
    %s62 = sadd.s32 %s61, 1
    %p65 = scmp.eq.s32.totalorder %s13, 3
    %p66 = scmp.ne.s32.totalorder %s61, %s63
    %p67 = scmp.eq.s32.totalorder %s13, 0
    %p68 = por %p66, %p67
    %p69 = scmp.ne.s32.totalorder %s61, %s63
    %p70 = scmp.eq.s32.totalorder %s18, 3
    %p71 = por %p69, %p70
    %p72 = scmp.ne.s32.totalorder %s63, %s64
    %p73 = scmp.eq.s32.totalorder %s18, 0
    %p74 = por %p72, %p73
    %p75 = scmp.ne.s32.totalorder %s63, %s64
    %p76 = scmp.eq.s32.totalorder %s19, 3
    %p77 = por %p75, %p76
    %p79 = scmp.ne.s32.totalorder %s64, %s78
    %p80 = scmp.eq.s32.totalorder %s19, 0
    %p81 = por %p79, %p80
    %s83 = sadd.s32 %s82, 1
    %p86 = scmp.eq.s32.totalorder %s13, 3
    %p87 = scmp.ne.s32.totalorder %s82, %s84
    %p88 = scmp.eq.s32.totalorder %s13, 0
    %p89 = por %p87, %p88
    %p90 = scmp.ne.s32.totalorder %s82, %s84
    %p91 = scmp.eq.s32.totalorder %s18, 3
    %p92 = por %p90, %p91
    %p93 = scmp.ne.s32.totalorder %s84, %s85
    %p94 = scmp.eq.s32.totalorder %s18, 0
    %p95 = por %p93, %p94
    %p96 = scmp.ne.s32.totalorder %s84, %s85
    %p97 = scmp.eq.s32.totalorder %s19, 3
    %p98 = por %p96, %p97
    %p100 = scmp.ne.s32.totalorder %s85, %s99
    %p101 = scmp.eq.s32.totalorder %s19, 0
    %p102 = por %p100, %p101
    %s104 = sadd.s32 %s103, 1
    %p107 = scmp.eq.s32.totalorder %s13, 3
    %p108 = scmp.ne.s32.totalorder %s103, %s105
    %p109 = scmp.eq.s32.totalorder %s13, 0
    %p110 = por %p108, %p109
    %p111 = scmp.ne.s32.totalorder %s103, %s105
    %p112 = scmp.eq.s32.totalorder %s18, 3
    %p113 = por %p111, %p112
    %p114 = scmp.ne.s32.totalorder %s105, %s106
    %p115 = scmp.eq.s32.totalorder %s18, 0
    %p116 = por %p114, %p115
    %p117 = scmp.ne.s32.totalorder %s105, %s106
    %p118 = scmp.eq.s32.totalorder %s19, 3
    %p119 = por %p117, %p118
    %p121 = scmp.ne.s32.totalorder %s106, %s120
    %p122 = scmp.eq.s32.totalorder %s19, 0
    %p123 = por %p121, %p122
    %s125 = sadd.s32 %s124, 1
    %p128 = scmp.eq.s32.totalorder %s13, 3
    %p129 = scmp.ne.s32.totalorder %s124, %s126
    %p130 = scmp.eq.s32.totalorder %s13, 0
    %p131 = por %p129, %p130
    %p132 = scmp.ne.s32.totalorder %s124, %s126
    %p133 = scmp.eq.s32.totalorder %s18, 3
    %p134 = por %p132, %p133
    %p135 = scmp.ne.s32.totalorder %s126, %s127
    %p136 = scmp.eq.s32.totalorder %s18, 0
    %p137 = por %p135, %p136
    %p138 = scmp.ne.s32.totalorder %s126, %s127
    %p139 = scmp.eq.s32.totalorder %s19, 3
    %p140 = por %p138, %p139
    %p142 = scmp.ne.s32.totalorder %s127, %s141
    %p143 = scmp.eq.s32.totalorder %s19, 0
    %p144 = por %p142, %p143
    %s146 = sadd.s32 %s145, 1
    %p149 = scmp.eq.s32.totalorder %s13, 3
    %p150 = scmp.ne.s32.totalorder %s145, %s147
    %p151 = scmp.eq.s32.totalorder %s13, 0
    %p152 = por %p150, %p151
    %p153 = scmp.ne.s32.totalorder %s145, %s147
    %p154 = scmp.eq.s32.totalorder %s18, 3
    %p155 = por %p153, %p154
    %p156 = scmp.ne.s32.totalorder %s147, %s148
    %p157 = scmp.eq.s32.totalorder %s18, 0
    %p158 = por %p156, %p157
    %p159 = scmp.ne.s32.totalorder %s147, %s148
    %p160 = scmp.eq.s32.totalorder %s19, 3
    %p161 = por %p159, %p160
    %p163 = scmp.ne.s32.totalorder %s148, %s162
    %p164 = scmp.eq.s32.totalorder %s19, 0
    %p165 = por %p163, %p164
    %s167 = sadd.s32 %s166, 1
    %p170 = scmp.eq.s32.totalorder %s13, 3
    %p171 = scmp.ne.s32.totalorder %s166, %s168
    %p172 = scmp.eq.s32.totalorder %s13, 0
    %p173 = por %p171, %p172
    %p174 = scmp.ne.s32.totalorder %s166, %s168
    %p175 = scmp.eq.s32.totalorder %s18, 3
    %p176 = por %p174, %p175
    %p177 = scmp.ne.s32.totalorder %s168, %s169
    %p178 = scmp.eq.s32.totalorder %s18, 0
    %p179 = por %p177, %p178
    %p180 = scmp.ne.s32.totalorder %s168, %s169
    %p181 = scmp.eq.s32.totalorder %s19, 3
    %p182 = por %p180, %p181
    %p184 = scmp.ne.s32.totalorder %s169, %s183
    %p185 = scmp.eq.s32.totalorder %s19, 0
    %p186 = por %p184, %p185
    %s187 = ssub.s32 %s20, %s32
    %s188 = ssub.s32 %s21, %s28
    %s189 = sor.u32 %s187, %s188
    %p190 = scmp.eq.s32.totalorder %s189, 0
    %s192 = sadd.s32 %s191, 1
    %s193 = scalar_select %p190, %s191, %s192
    %p196 = pneg %p190
    %p197 = scmp.eq.s32.totalorder %s13, 3
    %p198 = por %p196, %p197
    %p199 = scmp.ne.s32.totalorder %s191, %s194
    %p200 = scmp.eq.s32.totalorder %s13, 0
    %p201 = por %p199, %p200
    %p202 = scmp.ne.s32.totalorder %s191, %s194
    %p203 = scmp.eq.s32.totalorder %s18, 3
    %p204 = por %p202, %p203
    %p205 = scmp.ne.s32.totalorder %s194, %s195
    %p206 = scmp.eq.s32.totalorder %s18, 0
    %p207 = por %p205, %p206
    %p208 = scmp.ne.s32.totalorder %s194, %s195
    %p209 = scmp.eq.s32.totalorder %s19, 3
    %p210 = por %p208, %p209
    %p212 = scmp.ne.s32.totalorder %s195, %s211
    %p213 = scmp.eq.s32.totalorder %s19, 0
    %p214 = por %p212, %p213
    %p215 = scmp.le.s32.totalorder 1, %s13
    %p216 = scmp.lt.s32.totalorder %s13, 5
    %p217 = pnand %p215, %p216
    %p218 = pneg %p217
    // Predicated region
    $region9: #{pixel_discriminator.3} parent=5 // pred_check
      _
    $region10: #{pixel_discriminator.3} parent=5 // pred_check_branch
      %220 = sbr.rel (%p217) target = $region12
    $region11: #{pixel_discriminator.3} parent=5 // pred_region
      %s221 = ssub.s32 %s13, 1
      // Predicated region
      $region13: #{pixel_discriminator.3} parent=11 // pred_check
        %p222 = pneg %p74
      $region14: #{pixel_discriminator.3} parent=11 // pred_check_branch
        %224 = sbr.rel (%p222) target = $region16
      $region15: #{pixel_discriminator.3} parent=11 // pred_region
        _
      $region16: #{pixel_discriminator.3} parent=11 // pred_fallthru
        _
      // Predicated region
      $region17: #{pixel_discriminator.3} parent=11 // pred_check
        %p225 = pneg %p95
      $region18: #{pixel_discriminator.3} parent=11 // pred_check_branch
        %227 = sbr.rel (%p225) target = $region20
      $region19: #{pixel_discriminator.3} parent=11 // pred_region
        _
      $region20: #{pixel_discriminator.3} parent=11 // pred_fallthru
        _
      // Predicated region
      $region21: #{pixel_discriminator.3} parent=11 // pred_check
        %p228 = pneg %p116
      $region22: #{pixel_discriminator.3} parent=11 // pred_check_branch
        %230 = sbr.rel (%p228) target = $region24
      $region23: #{pixel_discriminator.3} parent=11 // pred_region
        _
      $region24: #{pixel_discriminator.3} parent=11 // pred_fallthru
        _
      // Predicated region
      $region25: #{pixel_discriminator.3} parent=11 // pred_check
        %p231 = pneg %p137
      $region26: #{pixel_discriminator.3} parent=11 // pred_check_branch
        %233 = sbr.rel (%p231) target = $region28
      $region27: #{pixel_discriminator.3} parent=11 // pred_region
        _
      $region28: #{pixel_discriminator.3} parent=11 // pred_fallthru
        _
      // Predicated region
      $region29: #{pixel_discriminator.3} parent=11 // pred_check
        %p234 = pneg %p158
      $region30: #{pixel_discriminator.3} parent=11 // pred_check_branch
        %236 = sbr.rel (%p234) target = $region32
      $region31: #{pixel_discriminator.3} parent=11 // pred_region
        _
      $region32: #{pixel_discriminator.3} parent=11 // pred_fallthru
        _
      // Predicated region
      $region33: #{pixel_discriminator.3} parent=11 // pred_check
        %p237 = pneg %p179
      $region34: #{pixel_discriminator.3} parent=11 // pred_check_branch
        %239 = sbr.rel (%p237) target = $region36
      $region35: #{pixel_discriminator.3} parent=11 // pred_region
        _
      $region36: #{pixel_discriminator.3} parent=11 // pred_fallthru
        _
    $region12: #{pixel_discriminator.3} parent=5 // pred_fallthru
      _
    %p240 = scmp.lt.s32.totalorder %s13, 4
    // Predicated region
    $region37: #{pixel_discriminator.3} parent=5 // pred_check
      %p241 = pneg %p240
    $region38: #{pixel_discriminator.3} parent=5 // pred_check_branch
      %243 = sbr.rel (%p241) target = $region40
    $region39: #{pixel_discriminator.3} parent=5 // pred_region
      // Predicated region
      $region41: #{pixel_discriminator.3} parent=39 // pred_check
        %p244 = pneg %p47
      $region42: #{pixel_discriminator.3} parent=39 // pred_check_branch
        %246 = sbr.rel (%p244) target = $region44
      $region43: #{pixel_discriminator.3} parent=39 // pred_region
        %p247 = scmp.lt.s32.totalorder %s20, 1
        %s248 = scalar_select %p247, %s20, 1
        %p249 = scmp.lt.s32.totalorder %s21, 1
        %s250 = scalar_select %p249, %s21, 1
        %s251 = smul.addr %s248, 2
        %s252 = sadd.s32 %s250, %s251
        %s253 = smul.addr %s252, 2
        %s254 = scalar_lea.vmem %s0, %s253
      $region44: #{pixel_discriminator.3} parent=39 // pred_fallthru
        _
    $region40: #{pixel_discriminator.3} parent=5 // pred_fallthru
      _
    %p255 = scmp.le.s32.totalorder 1, %s13
    %p256 = scmp.lt.s32.totalorder %s13, 5
    %p257 = pnand %p255, %p256
    %p258 = pneg %p257
    // Predicated region
    $region45: #{pixel_discriminator.3} parent=5 // pred_check
      _
    $region46: #{pixel_discriminator.3} parent=5 // pred_check_branch
      %260 = sbr.rel (%p257) target = $region48
    $region47: #{pixel_discriminator.3} parent=5 // pred_region
      %s261 = ssub.s32 %s13, 1
      %p262 = scmp.lt.s32.totalorder %s22, 1
      %s263 = scalar_select %p262, %s22, 1
      %p264 = scmp.lt.s32.totalorder %s23, 1
      %s265 = scalar_select %p264, %s23, 1
      %s266 = smul.addr %s263, 2
      %s267 = sadd.s32 %s265, %s266
      %s268 = smul.addr %s267, 2
      %s269 = scalar_lea.vmem %s0, %s268
      %p270 = pneg %p53
      %p271 = pneg %p50
      %p272 = pneg %p74
      %p273 = pneg %p71
      %p274 = pneg %p95
      %p275 = pneg %p92
      %p276 = pneg %p116
      %p277 = pneg %p113
      %p278 = pneg %p137
      %p279 = pneg %p134
      %p280 = pneg %p158
      %p281 = pneg %p155
      %p282 = pneg %p179
      %p283 = pneg %p176
      %p284 = pneg %p207
      %p285 = pneg %p204
      %p286 = scmp.lt.s32.totalorder %s22, 1
      %s287 = scalar_select %p286, %s22, 1
      %p288 = scmp.lt.s32.totalorder %s23, 1
      %s289 = scalar_select %p288, %s23, 1
      %s290 = smul.addr %s287, 2
      %s291 = sadd.s32 %s289, %s290
      %s292 = scalar_lea.vmem %s7, %s291
      %p293 = scmp.lt.s32.totalorder %s22, 1
      %s294 = scalar_select %p293, %s22, 1
      %p295 = scmp.lt.s32.totalorder %s23, 1
      %s296 = scalar_select %p295, %s23, 1
      %s297 = smul.addr %s294, 2
      %s298 = sadd.s32 %s296, %s297
      %s299 = smul.addr %s298, 2
      %s300 = scalar_lea.vmem %s0, %s299
      %p301 = scmp.lt.s32.totalorder %s22, 1
      %s302 = scalar_select %p301, %s22, 1
      %p303 = scmp.lt.s32.totalorder %s23, 1
      %s304 = scalar_select %p303, %s23, 1
      %s305 = smul.addr %s302, 2
      %s306 = sadd.s32 %s304, %s305
      %s307 = scalar_lea.vmem %s7, %s306
      %v308 = vld [vmem:[%s300] sm:$0x3]
      %v309 = vld [vmem:[%s1] sm:$0xff]
      %v310 = vld [vmem:[%s2] sm:$0xff]
      %v311 = vld [vmem:[%s3] sm:$0xff]
      %v312 = vld [vmem:[%s3 + $0x8] sm:$0xff]
      %v313 = vunpack.c.l.bf16 %v308
      %315 = vset.pattern.permute.xlu0 0
      %316 = vperm.xlu0 %315, %v310
      %v317 = vpop.permute.xlu0 %316
      %vm319 = vcmask 31744
      %v321 = vsel %vm319, %v309, 0
      %vm323 = vcmask 1043456
      %v325 = vsel %vm323, %v313, 0
      %327 = vmatprep.subr.mxu0 0.0
      %328 = vmatpush1.msra.mxu0 %v325
      %329 = vmatprep.subr.mxu0 0.0
      %330 = vmatpush1.msra.mxu0 0.0
      %331 = vmatprep.subr.mxu0 0.0
      %332 = vmatpush1.msra.mxu0 0.0
      %333 = vmatprep.subr.mxu0 0.0
      %334 = vmatpush1.msra.mxu0 0.0
      %335 = vmatprep.subr.mxu0 0.0
      %336 = vmatpush1.msra.mxu0 0.0
      %337 = vmatprep.subr.mxu0 0.0
      %338 = vmatpush1.msra.mxu0 0.0
      %339 = vmatprep.subr.mxu0 0.0
      %340 = vmatpush1.msra.mxu0 0.0
      %341 = vmatprep.subr.mxu0 0.0
      %342 = vmatpush1.msra.mxu0 0.0
      %343 = vmatprep.subr.mxu0 0.0
      %344 = vmatpush1.msra.mxu0 0.0
      %345 = vmatprep.subr.mxu0 0.0
      %346 = vmatpush1.msra.mxu0 0.0
      %347 = vmatprep.subr.mxu0 0.0
      %348 = vmatpush1.msra.mxu0 0.0
      %349 = vmatprep.subr.mxu0 0.0
      %350 = vmatpush1.msra.mxu0 0.0
      %351 = vmatprep.subr.mxu0 0.0
      %352 = vmatpush1.msra.mxu0 0.0
      %353 = vmatprep.subr.mxu0 0.0
      %354 = vmatpush1.msra.mxu0 0.0
      %355 = vmatprep.subr.mxu0 0.0
      %356 = vmatpush1.msra.mxu0 0.0
      %357 = vmatprep.subr.mxu0 0.0
      %358 = vmatpush1.msra.mxu0 0.0
      %359 = vmatprep.subr.mxu0 0.0
      %360 = vmatpush1.msra.mxu0 0.0
      %361 = vmatprep.subr.mxu0 0.0
      %362 = vmatpush1.msra.mxu0 0.0
      %363 = vmatprep.subr.mxu0 0.0
      %364 = vmatpush1.msra.mxu0 0.0
      %365 = vmatprep.subr.mxu0 0.0
      %366 = vmatpush1.msra.mxu0 0.0
      %367 = vmatprep.subr.mxu0 0.0
      %368 = vmatpush1.msra.mxu0 0.0
      %369 = vmatprep.subr.mxu0 0.0
      %370 = vmatpush1.msra.mxu0 0.0
      %371 = vmatprep.subr.mxu0 0.0
      %372 = vmatpush1.msra.mxu0 0.0
      %373 = vmatprep.subr.mxu0 0.0
      %374 = vmatpush1.msra.mxu0 0.0
      %375 = vmatprep.subr.mxu0 0.0
      %376 = vmatpush1.msra.mxu0 0.0
      %377 = vmatprep.subr.mxu0 0.0
      %378 = vmatpush1.msra.mxu0 0.0
      %379 = vmatprep.subr.mxu0 0.0
      %380 = vmatpush1.msra.mxu0 0.0
      %381 = vmatprep.subr.mxu0 0.0
      %382 = vmatpush1.msra.mxu0 0.0
      %383 = vmatprep.subr.mxu0 0.0
      %384 = vmatpush1.msra.mxu0 0.0
      %385 = vmatprep.subr.mxu0 0.0
      %386 = vmatpush1.msra.mxu0 0.0
      %387 = vmatprep.subr.mxu0 0.0
      %388 = vmatpush1.msra.mxu0 0.0
      %389 = vmatprep.subr.mxu0 0.0
      %390 = vmatpush1.msra.mxu0 0.0
      %391 = vmatprep.mubr.f32.mxu0 0.0
      %392 = vmatmul.mubr.f32.gmra.mrb[0].mxu0 %v321
      %v393 = vpop.f32.mrb[0].mxu0
      %v394 = vadd.f32 %v317, %v393
      %v395 = vpop.f32.mrb[0].mxu0
      %396 = vdwg.mxu0
      %vm397 = vcmp.ge.f32.partialorder %v394, 0.0
      %v398 = vmul.f32 %v394, 0.2
      %v399 = vsel %vm397, %v394, %v398
      %vm400 = vcmask 64512
      %v402 = vsel %vm400, %v311, 0
      %v405 = vsel %vm400, %v312, 0
      %407 = vmatprep.subr.mxu0 0.0
      %408 = vmatpush1.msra.mxu0 %v399
      %409 = vmatprep.subr.mxu0 0.0
      %410 = vmatpush1.msra.mxu0 0.0
      %411 = vmatprep.subr.mxu0 0.0
      %412 = vmatpush1.msra.mxu0 0.0
      %413 = vmatprep.subr.mxu0 0.0
      %414 = vmatpush1.msra.mxu0 0.0
      %415 = vmatprep.subr.mxu0 0.0
      %416 = vmatpush1.msra.mxu0 0.0
      %417 = vmatprep.subr.mxu0 0.0
      %418 = vmatpush1.msra.mxu0 0.0
      %419 = vmatprep.subr.mxu0 0.0
      %420 = vmatpush1.msra.mxu0 0.0
      %421 = vmatprep.subr.mxu0 0.0
      %422 = vmatpush1.msra.mxu0 0.0
      %423 = vmatprep.subr.mxu0 0.0
      %424 = vmatpush1.msra.mxu0 0.0
      %425 = vmatprep.subr.mxu0 0.0
      %426 = vmatpush1.msra.mxu0 0.0
      %427 = vmatprep.subr.mxu0 0.0
      %428 = vmatpush1.msra.mxu0 0.0
      %429 = vmatprep.subr.mxu0 0.0
      %430 = vmatpush1.msra.mxu0 0.0
      %431 = vmatprep.subr.mxu0 0.0
      %432 = vmatpush1.msra.mxu0 0.0
      %433 = vmatprep.subr.mxu0 0.0
      %434 = vmatpush1.msra.mxu0 0.0
      %435 = vmatprep.subr.mxu0 0.0
      %436 = vmatpush1.msra.mxu0 0.0
      %437 = vmatprep.subr.mxu0 0.0
      %438 = vmatpush1.msra.mxu0 0.0
      %439 = vmatprep.subr.mxu0 0.0
      %440 = vmatpush1.msra.mxu0 0.0
      %441 = vmatprep.subr.mxu0 0.0
      %442 = vmatpush1.msra.mxu0 0.0
      %443 = vmatprep.subr.mxu0 0.0
      %444 = vmatpush1.msra.mxu0 0.0
      %445 = vmatprep.subr.mxu0 0.0
      %446 = vmatpush1.msra.mxu0 0.0
      %447 = vmatprep.subr.mxu0 0.0
      %448 = vmatpush1.msra.mxu0 0.0
      %449 = vmatprep.subr.mxu0 0.0
      %450 = vmatpush1.msra.mxu0 0.0
      %451 = vmatprep.subr.mxu0 0.0
      %452 = vmatpush1.msra.mxu0 0.0
      %453 = vmatprep.subr.mxu0 0.0
      %454 = vmatpush1.msra.mxu0 0.0
      %455 = vmatprep.subr.mxu0 0.0
      %456 = vmatpush1.msra.mxu0 0.0
      %457 = vmatprep.subr.mxu0 0.0
      %458 = vmatpush1.msra.mxu0 0.0
      %459 = vmatprep.subr.mxu0 0.0
      %460 = vmatpush1.msra.mxu0 0.0
      %461 = vmatprep.subr.mxu0 0.0
      %462 = vmatpush1.msra.mxu0 0.0
      %463 = vmatprep.subr.mxu0 0.0
      %464 = vmatpush1.msra.mxu0 0.0
      %465 = vmatprep.subr.mxu0 0.0
      %466 = vmatpush1.msra.mxu0 0.0
      %467 = vmatprep.subr.mxu0 0.0
      %468 = vmatpush1.msra.mxu0 0.0
      %469 = vmatprep.subr.mxu0 0.0
      %470 = vmatpush1.msra.mxu0 0.0
      %471 = vmatprep.mubr.f32.mxu0 0.0
      %472 = vmatmul.mubr.f32.gmra.mrb[0].mxu0 %v402
      %v473 = vpop.f32.mrb[0].mxu0
      %v474 = vadd.f32 0.0, %v473
      %v475 = vpop.f32.mrb[0].mxu0
      %476 = vmatprep.mubr.f32.mxu0 0.0
      %477 = vmatmul.mubr.f32.gmra.mrb[0].mxu0 %v405
      %v478 = vpop.f32.mrb[0].mxu0
      %v479 = vadd.f32 0.0, %v478
      %v480 = vpop.f32.mrb[0].mxu0
      %481 = vdwg.mxu0
      %v482 = vld [vmem:[%s4] sm:$0xff]
      %v483 = vld [vmem:[%s4 + $0x8] sm:$0xff]
      %485 = vset.pattern.permute.xlu0 0
      %486 = vperm.xlu0 %485, %v482
      %v487 = vpop.permute.xlu0 %486
      %490 = vset.pattern.permute.xlu0 0
      %491 = vperm.xlu0 %490, %v483
      %v492 = vpop.permute.xlu0 %491
      %v494 = vmul.f32 %v474, %v487
      %v495 = vmul.f32 %v479, %v492
      %v496 = vld [vmem:[%s5] sm:$0xff]
      %v497 = vld [vmem:[%s5 + $0x8] sm:$0xff]
      %499 = vset.pattern.permute.xlu0 0
      %500 = vperm.xlu0 %499, %v496
      %v501 = vpop.permute.xlu0 %500
      %504 = vset.pattern.permute.xlu0 0
      %505 = vperm.xlu0 %504, %v497
      %v506 = vpop.permute.xlu0 %505
      %v508 = vadd.f32 %v494, %v501
      %v509 = vadd.f32 %v495, %v506
      %vm510 = vcmp.ge.f32.partialorder %v508, 0.0
      %vm511 = vcmp.ge.f32.partialorder %v509, 0.0
      %v512 = vmul.f32 %v508, 0.2
      %v513 = vmul.f32 %v509, 0.2
      %v514 = vsel %vm510, %v508, %v512
      %v515 = vsel %vm511, %v509, %v513
      %v516 = vld [vmem:[%s6] sm:$0x1]
      %vm517 = vcmask 130048
      %v519 = vsel %vm517, %v516, 0
      %521 = vmatprep.subr.mxu0 0.0
      %522 = vmatpush1.msra.mxu0 %v514
      %523 = vmatprep.subr.mxu0 0.0
      %524 = vmatpush1.msra.mxu0 %v515
      %525 = vmatprep.subr.mxu0 0.0
      %526 = vmatpush1.msra.mxu0 0.0
      %527 = vmatprep.subr.mxu0 0.0
      %528 = vmatpush1.msra.mxu0 0.0
      %529 = vmatprep.subr.mxu0 0.0
      %530 = vmatpush1.msra.mxu0 0.0
      %531 = vmatprep.subr.mxu0 0.0
      %532 = vmatpush1.msra.mxu0 0.0
      %533 = vmatprep.subr.mxu0 0.0
      %534 = vmatpush1.msra.mxu0 0.0
      %535 = vmatprep.subr.mxu0 0.0
      %536 = vmatpush1.msra.mxu0 0.0
      %537 = vmatprep.subr.mxu0 0.0
      %538 = vmatpush1.msra.mxu0 0.0
      %539 = vmatprep.subr.mxu0 0.0
      %540 = vmatpush1.msra.mxu0 0.0
      %541 = vmatprep.subr.mxu0 0.0
      %542 = vmatpush1.msra.mxu0 0.0
      %543 = vmatprep.subr.mxu0 0.0
      %544 = vmatpush1.msra.mxu0 0.0
      %545 = vmatprep.subr.mxu0 0.0
      %546 = vmatpush1.msra.mxu0 0.0
      %547 = vmatprep.subr.mxu0 0.0
      %548 = vmatpush1.msra.mxu0 0.0
      %549 = vmatprep.subr.mxu0 0.0
      %550 = vmatpush1.msra.mxu0 0.0
      %551 = vmatprep.subr.mxu0 0.0
      %552 = vmatpush1.msra.mxu0 0.0
      %553 = vmatprep.subr.mxu0 0.0
      %554 = vmatpush1.msra.mxu0 0.0
      %555 = vmatprep.subr.mxu0 0.0
      %556 = vmatpush1.msra.mxu0 0.0
      %557 = vmatprep.subr.mxu0 0.0
      %558 = vmatpush1.msra.mxu0 0.0
      %559 = vmatprep.subr.mxu0 0.0
      %560 = vmatpush1.msra.mxu0 0.0
      %561 = vmatprep.subr.mxu0 0.0
      %562 = vmatpush1.msra.mxu0 0.0
      %563 = vmatprep.subr.mxu0 0.0
      %564 = vmatpush1.msra.mxu0 0.0
      %565 = vmatprep.subr.mxu0 0.0
      %566 = vmatpush1.msra.mxu0 0.0
      %567 = vmatprep.subr.mxu0 0.0
      %568 = vmatpush1.msra.mxu0 0.0
      %569 = vmatprep.subr.mxu0 0.0
      %570 = vmatpush1.msra.mxu0 0.0
      %571 = vmatprep.subr.mxu0 0.0
      %572 = vmatpush1.msra.mxu0 0.0
      %573 = vmatprep.subr.mxu0 0.0
      %574 = vmatpush1.msra.mxu0 0.0
      %575 = vmatprep.subr.mxu0 0.0
      %576 = vmatpush1.msra.mxu0 0.0
      %577 = vmatprep.subr.mxu0 0.0
      %578 = vmatpush1.msra.mxu0 0.0
      %579 = vmatprep.subr.mxu0 0.0
      %580 = vmatpush1.msra.mxu0 0.0
      %581 = vmatprep.subr.mxu0 0.0
      %582 = vmatpush1.msra.mxu0 0.0
      %583 = vmatprep.subr.mxu0 0.0
      %584 = vmatpush1.msra.mxu0 0.0
      %585 = vmatprep.mubr.f32.mxu0 0.0
      %586 = vmatmul.mubr.f32.gmra.mrb[0].mxu0 %v519
      %v587 = vpop.f32.mrb[0].mxu0
      %v588 = vadd.f32 0.0, %v587
      %v589 = vpop.f32.mrb[0].mxu0
      %590 = vdwg.mxu0
      %591 = vst [vmem:[%s307] sm:$0x1] %v588
      %p592 = scmp.lt.s32.totalorder %s22, 1
      %s593 = scalar_select %p592, %s22, 1
      %p594 = scmp.lt.s32.totalorder %s23, 1
      %s595 = scalar_select %p594, %s23, 1
      %s596 = smul.addr %s593, 2
      %s597 = sadd.s32 %s595, %s596
      %s598 = scalar_lea.vmem %s7, %s597
      // Predicated region
      $region49: #{pixel_discriminator.3} parent=47 // pred_check
        %p599 = pneg %p204
      $region50: #{pixel_discriminator.3} parent=47 // pred_check_branch
        %601 = sbr.rel (%p599) target = $region52
      $region51: #{pixel_discriminator.3} parent=47 // pred_region
        _
      $region52: #{pixel_discriminator.3} parent=47 // pred_fallthru
        _
    $region48: #{pixel_discriminator.3} parent=5 // pred_fallthru
      _
    %p602 = scmp.le.s32.totalorder 2, %s13
    // Predicated region
    $region53: #{pixel_discriminator.3} parent=5 // pred_check
      %p603 = pneg %p602
    $region54: #{pixel_discriminator.3} parent=5 // pred_check_branch
      %605 = sbr.rel (%p603) target = $region56
    $region55: #{pixel_discriminator.3} parent=5 // pred_region
      %s606 = ssub.s32 %s13, 2
      // Predicated region
      $region57: #{pixel_discriminator.3} parent=55 // pred_check
        %p607 = pneg %p210
      $region58: #{pixel_discriminator.3} parent=55 // pred_check_branch
        %609 = sbr.rel (%p607) target = $region60
      $region59: #{pixel_discriminator.3} parent=55 // pred_region
        %p610 = scmp.lt.s32.totalorder %s24, 1
        %s611 = scalar_select %p610, %s24, 1
        %p612 = scmp.lt.s32.totalorder %s25, 1
        %s613 = scalar_select %p612, %s25, 1
        %s614 = smul.addr %s611, 2
        %s615 = sadd.s32 %s613, %s614
        %s616 = scalar_lea.vmem %s7, %s615
      $region60: #{pixel_discriminator.3} parent=55 // pred_fallthru
        _
    $region56: #{pixel_discriminator.3} parent=5 // pred_fallthru
      _
  $region6: #{pixel_discriminator.3} parent=0 // loop_footer
    %s17 = sadd.s32 1, %s13
  $region7: #{pixel_discriminator.3} parent=0 // loop_footer_branch
    %12 = sbr.rel target = $region3
  $region8: #{pixel_discriminator.3} parent=0 // loop_exit
    _

// kernel: pixel_discriminator.2
$region0: #{pixel_discriminator.2}
  #allocation0 [shape = 'u32[]', space=smem, size = 0x4, offset = 0x4, fixed_abs, tag = 'smem constant byte address 0x4 - core index']
  #allocation1 [shape = 'u32[144,128]{1,0:T(1,128)}', space=vmem, size = 0x12000, scoped, tag = 'internal scratch']
  %s0 = inlined_call_operand.vmem [shape: bf16[2,4,256], index: 0, kind: input, shape index: {}]
  %s1 = inlined_call_operand.vmem [shape: f32[8,4], index: 1, kind: input, shape index: {}]
  %s2 = inlined_call_operand.vmem [shape: f32[8,1], index: 2, kind: input, shape index: {}]
  %s3 = inlined_call_operand.vmem [shape: f32[16,8], index: 3, kind: input, shape index: {}]
  %s4 = inlined_call_operand.vmem [shape: f32[2,1,16,1], index: 4, kind: output, shape index: {0}]
  %s5 = inlined_call_operand.vmem [shape: f32[2,1,16,1], index: 5, kind: output, shape index: {1}]
  %6 = xla_tuple %s4, %s5
  %s7 = sld [smem:[#allocation0]]
  $region61: #{pixel_discriminator.2} parent=0
    _
  %s9 = ssub.s32 1, %s7
  %s10 = scalar_select 0, %s9, %s7
  loop: start=0, step=1, limit=6
  $region2: #{pixel_discriminator.2} parent=0 // loop_pre_header
    _
  $region3: #{pixel_discriminator.2} parent=0 // loop_header
    %s12 = sphi 0, %s16
    %p13 = scmp.ge.s32.totalorder %s12, 6
    %s19 = sphi 0, %s38
    %s20 = sphi 0, %s34
    %s21 = sphi 0, %s30
    %s22 = sphi 0, %s19
    %s23 = sphi 0, %s20
    %s24 = sphi 0, %s21
    %s25 = sphi 0, %s22
    %s26 = sphi 0, %s23
    %s27 = sphi 0, %s24
    %s47 = sphi 0, %s49
    %s50 = sphi 0, %s47
    %s51 = sphi 0, %s50
    %s67 = sphi 0, %s51
    %s71 = sphi 0, %s71
    %s73 = sphi 0, %s71
    %s74 = sphi 0, %s73
    %s88 = sphi 0, %s74
    %s92 = sphi 0, %s92
    %s94 = sphi 0, %s92
    %s95 = sphi 0, %s94
    %s109 = sphi 0, %s95
    %s113 = sphi 0, %s113
    %s115 = sphi 0, %s113
    %s116 = sphi 0, %s115
    %s130 = sphi 0, %s116
    %s138 = sphi 0, %s140
    %s141 = sphi 0, %s138
    %s142 = sphi 0, %s141
    %s158 = sphi 0, %s142
    %s166 = sphi 0, %s168
    %s169 = sphi 0, %s166
    %s170 = sphi 0, %s169
    %s186 = sphi 0, %s170
  $region4: #{pixel_discriminator.2} parent=0 // loop_header_branch
    %15 = sbr.rel (%p13) target = $region8
  $region5: #{pixel_discriminator.2} parent=0 // loop_body
    %s17 = ssub.s32 %s12, 1
    %s18 = ssub.s32 %s12, 2
    %s28 = sadd.s32 1, %s21
    %p29 = scmp.ge.s32.totalorder %s28, 2
    %s30 = scalar_select %p29, 0, %s28
    %s31 = sadd.s32 1, %s20
    %s32 = scalar_select %p29, %s31, %s20
    %p33 = scmp.ge.s32.totalorder %s32, 1
    %s34 = scalar_select %p33, 0, %s32
    %s35 = sadd.s32 1, %s19
    %s36 = scalar_select %p33, %s35, %s19
    %p37 = scmp.ge.s32.totalorder %s36, 2
    %s38 = scalar_select %p37, 0, %s36
    %s39 = smul.u32 %s20, 2
    %s40 = sadd.s32 %s39, %s21
    %s41 = smul.u32 %s34, 2
    %s42 = sadd.s32 %s41, %s30
    %s43 = ssub.s32 %s19, %s38
    %s44 = ssub.s32 %s40, %s42
    %s45 = sor.u32 %s43, %s44
    %p46 = scmp.eq.s32.totalorder %s45, 0
    %s48 = sadd.s32 %s47, 1
    %s49 = scalar_select %p46, %s47, %s48
    %p52 = pneg %p46
    %p53 = scmp.eq.s32.totalorder %s12, 3
    %p54 = por %p52, %p53
    %p55 = scmp.ne.s32.totalorder %s47, %s50
    %p56 = scmp.eq.s32.totalorder %s12, 0
    %p57 = por %p55, %p56
    %p58 = scmp.ne.s32.totalorder %s47, %s50
    %p59 = scmp.eq.s32.totalorder %s17, 3
    %p60 = por %p58, %p59
    %p61 = scmp.ne.s32.totalorder %s50, %s51
    %p62 = scmp.eq.s32.totalorder %s17, 0
    %p63 = por %p61, %p62
    %p64 = scmp.ne.s32.totalorder %s50, %s51
    %p65 = scmp.eq.s32.totalorder %s18, 3
    %p66 = por %p64, %p65
    %p68 = scmp.ne.s32.totalorder %s51, %s67
    %p69 = scmp.eq.s32.totalorder %s18, 0
    %p70 = por %p68, %p69
    %s72 = sadd.s32 %s71, 1
    %p75 = scmp.eq.s32.totalorder %s12, 3
    %p76 = scmp.ne.s32.totalorder %s71, %s73
    %p77 = scmp.eq.s32.totalorder %s12, 0
    %p78 = por %p76, %p77
    %p79 = scmp.ne.s32.totalorder %s71, %s73
    %p80 = scmp.eq.s32.totalorder %s17, 3
    %p81 = por %p79, %p80
    %p82 = scmp.ne.s32.totalorder %s73, %s74
    %p83 = scmp.eq.s32.totalorder %s17, 0
    %p84 = por %p82, %p83
    %p85 = scmp.ne.s32.totalorder %s73, %s74
    %p86 = scmp.eq.s32.totalorder %s18, 3
    %p87 = por %p85, %p86
    %p89 = scmp.ne.s32.totalorder %s74, %s88
    %p90 = scmp.eq.s32.totalorder %s18, 0
    %p91 = por %p89, %p90
    %s93 = sadd.s32 %s92, 1
    %p96 = scmp.eq.s32.totalorder %s12, 3
    %p97 = scmp.ne.s32.totalorder %s92, %s94
    %p98 = scmp.eq.s32.totalorder %s12, 0
    %p99 = por %p97, %p98
    %p100 = scmp.ne.s32.totalorder %s92, %s94
    %p101 = scmp.eq.s32.totalorder %s17, 3
    %p102 = por %p100, %p101
    %p103 = scmp.ne.s32.totalorder %s94, %s95
    %p104 = scmp.eq.s32.totalorder %s17, 0
    %p105 = por %p103, %p104
    %p106 = scmp.ne.s32.totalorder %s94, %s95
    %p107 = scmp.eq.s32.totalorder %s18, 3
    %p108 = por %p106, %p107
    %p110 = scmp.ne.s32.totalorder %s95, %s109
    %p111 = scmp.eq.s32.totalorder %s18, 0
    %p112 = por %p110, %p111
    %s114 = sadd.s32 %s113, 1
    %p117 = scmp.eq.s32.totalorder %s12, 3
    %p118 = scmp.ne.s32.totalorder %s113, %s115
    %p119 = scmp.eq.s32.totalorder %s12, 0
    %p120 = por %p118, %p119
    %p121 = scmp.ne.s32.totalorder %s113, %s115
    %p122 = scmp.eq.s32.totalorder %s17, 3
    %p123 = por %p121, %p122
    %p124 = scmp.ne.s32.totalorder %s115, %s116
    %p125 = scmp.eq.s32.totalorder %s17, 0
    %p126 = por %p124, %p125
    %p127 = scmp.ne.s32.totalorder %s115, %s116
    %p128 = scmp.eq.s32.totalorder %s18, 3
    %p129 = por %p127, %p128
    %p131 = scmp.ne.s32.totalorder %s116, %s130
    %p132 = scmp.eq.s32.totalorder %s18, 0
    %p133 = por %p131, %p132
    %s134 = ssub.s32 %s19, %s38
    %s135 = ssub.s32 %s20, %s34
    %s136 = sor.u32 %s134, %s135
    %p137 = scmp.eq.s32.totalorder %s136, 0
    %s139 = sadd.s32 %s138, 1
    %s140 = scalar_select %p137, %s138, %s139
    %p143 = pneg %p137
    %p144 = scmp.eq.s32.totalorder %s12, 3
    %p145 = por %p143, %p144
    %p146 = scmp.ne.s32.totalorder %s138, %s141
    %p147 = scmp.eq.s32.totalorder %s12, 0
    %p148 = por %p146, %p147
    %p149 = scmp.ne.s32.totalorder %s138, %s141
    %p150 = scmp.eq.s32.totalorder %s17, 3
    %p151 = por %p149, %p150
    %p152 = scmp.ne.s32.totalorder %s141, %s142
    %p153 = scmp.eq.s32.totalorder %s17, 0
    %p154 = por %p152, %p153
    %p155 = scmp.ne.s32.totalorder %s141, %s142
    %p156 = scmp.eq.s32.totalorder %s18, 3
    %p157 = por %p155, %p156
    %p159 = scmp.ne.s32.totalorder %s142, %s158
    %p160 = scmp.eq.s32.totalorder %s18, 0
    %p161 = por %p159, %p160
    %s162 = ssub.s32 %s19, %s38
    %s163 = ssub.s32 %s20, %s34
    %s164 = sor.u32 %s162, %s163
    %p165 = scmp.eq.s32.totalorder %s164, 0
    %s167 = sadd.s32 %s166, 1
    %s168 = scalar_select %p165, %s166, %s167
    %p171 = pneg %p165
    %p172 = scmp.eq.s32.totalorder %s12, 3
    %p173 = por %p171, %p172
    %p174 = scmp.ne.s32.totalorder %s166, %s169
    %p175 = scmp.eq.s32.totalorder %s12, 0
    %p176 = por %p174, %p175
    %p177 = scmp.ne.s32.totalorder %s166, %s169
    %p178 = scmp.eq.s32.totalorder %s17, 3
    %p179 = por %p177, %p178
    %p180 = scmp.ne.s32.totalorder %s169, %s170
    %p181 = scmp.eq.s32.totalorder %s17, 0
    %p182 = por %p180, %p181
    %p183 = scmp.ne.s32.totalorder %s169, %s170
    %p184 = scmp.eq.s32.totalorder %s18, 3
    %p185 = por %p183, %p184
    %p187 = scmp.ne.s32.totalorder %s170, %s186
    %p188 = scmp.eq.s32.totalorder %s18, 0
    %p189 = por %p187, %p188
    %p190 = scmp.le.s32.totalorder 1, %s12
    %p191 = scmp.lt.s32.totalorder %s12, 5
    %p192 = pnand %p190, %p191
    %p193 = pneg %p192
    // Predicated region
    $region9: #{pixel_discriminator.2} parent=5 // pred_check
      _
    $region10: #{pixel_discriminator.2} parent=5 // pred_check_branch
      %195 = sbr.rel (%p192) target = $region12
    $region11: #{pixel_discriminator.2} parent=5 // pred_region
      %s196 = ssub.s32 %s12, 1
      // Predicated region
      $region13: #{pixel_discriminator.2} parent=11 // pred_check
        %p197 = pneg %p84
      $region14: #{pixel_discriminator.2} parent=11 // pred_check_branch
        %199 = sbr.rel (%p197) target = $region16
      $region15: #{pixel_discriminator.2} parent=11 // pred_region
        _
      $region16: #{pixel_discriminator.2} parent=11 // pred_fallthru
        _
      // Predicated region
      $region17: #{pixel_discriminator.2} parent=11 // pred_check
        %p200 = pneg %p105
      $region18: #{pixel_discriminator.2} parent=11 // pred_check_branch
        %202 = sbr.rel (%p200) target = $region20
      $region19: #{pixel_discriminator.2} parent=11 // pred_region
        _
      $region20: #{pixel_discriminator.2} parent=11 // pred_fallthru
        _
      // Predicated region
      $region21: #{pixel_discriminator.2} parent=11 // pred_check
        %p203 = pneg %p126
      $region22: #{pixel_discriminator.2} parent=11 // pred_check_branch
        %205 = sbr.rel (%p203) target = $region24
      $region23: #{pixel_discriminator.2} parent=11 // pred_region
        _
      $region24: #{pixel_discriminator.2} parent=11 // pred_fallthru
        _
    $region12: #{pixel_discriminator.2} parent=5 // pred_fallthru
      _
    %p206 = scmp.lt.s32.totalorder %s12, 4
    // Predicated region
    $region25: #{pixel_discriminator.2} parent=5 // pred_check
      %p207 = pneg %p206
    $region26: #{pixel_discriminator.2} parent=5 // pred_check_branch
      %209 = sbr.rel (%p207) target = $region28
    $region27: #{pixel_discriminator.2} parent=5 // pred_region
      // Predicated region
      $region29: #{pixel_discriminator.2} parent=27 // pred_check
        %p210 = pneg %p57
      $region30: #{pixel_discriminator.2} parent=27 // pred_check_branch
        %212 = sbr.rel (%p210) target = $region32
      $region31: #{pixel_discriminator.2} parent=27 // pred_region
        %s213 = smul.u32 %s20, 2
        %s214 = sadd.s32 %s213, %s21
        %p215 = scmp.lt.s32.totalorder %s19, 1
        %s216 = scalar_select %p215, %s19, 1
        %p217 = scmp.lt.s32.totalorder %s214, 1
        %s218 = scalar_select %p217, %s214, 1
        %s219 = smul.addr %s216, 2
        %s220 = sadd.s32 %s218, %s219
        %s221 = smul.addr %s220, 2
        %s222 = scalar_lea.vmem %s0, %s221
        %s223 = smul.u32 %s20, 2
        %s224 = sadd.s32 %s223, %s21
      $region32: #{pixel_discriminator.2} parent=27 // pred_fallthru
        _
    $region28: #{pixel_discriminator.2} parent=5 // pred_fallthru
      _
    %p225 = scmp.le.s32.totalorder 1, %s12
    %p226 = scmp.lt.s32.totalorder %s12, 5
    %p227 = pnand %p225, %p226
    %p228 = pneg %p227
    // Predicated region
    $region33: #{pixel_discriminator.2} parent=5 // pred_check
      _
    $region34: #{pixel_discriminator.2} parent=5 // pred_check_branch
      %230 = sbr.rel (%p227) target = $region36
    $region35: #{pixel_discriminator.2} parent=5 // pred_region
      %s231 = ssub.s32 %s12, 1
      %s232 = smul.u32 %s23, 2
      %s233 = sadd.s32 %s232, %s24
      %p234 = scmp.lt.s32.totalorder %s22, 1
      %s235 = scalar_select %p234, %s22, 1
      %p236 = scmp.lt.s32.totalorder %s233, 1
      %s237 = scalar_select %p236, %s233, 1
      %s238 = smul.addr %s235, 2
      %s239 = sadd.s32 %s237, %s238
      %s240 = smul.addr %s239, 2
      %s241 = scalar_lea.vmem %s0, %s240
      %p242 = pneg %p63
      %p243 = pneg %p60
      %p244 = pneg %p84
      %p245 = pneg %p81
      %p246 = pneg %p105
      %p247 = pneg %p102
      %p248 = pneg %p126
      %p249 = pneg %p123
      %p250 = pneg %p154
      %p251 = pneg %p151
      %p252 = scmp.lt.s32.totalorder %s22, 1
      %s253 = scalar_select %p252, %s22, 1
      %p254 = scmp.lt.s32.totalorder %s23, 0
      %s255 = scalar_select %p254, %s23, 0
      %s256 = smul.addr %s255, 2
      %s257 = smul.addr %s253, 2
      %s258 = sadd.s32 %s256, %s257
      %s259 = smul.addr %s258, 8
      %s260 = scalar_lea.vmem %s4, %s259
      %p261 = pneg %p182
      %p262 = pneg %p179
      %p263 = scmp.lt.s32.totalorder %s22, 1
      %s264 = scalar_select %p263, %s22, 1
      %p265 = scmp.lt.s32.totalorder %s23, 0
      %s266 = scalar_select %p265, %s23, 0
      %s267 = smul.addr %s266, 2
      %s268 = smul.addr %s264, 2
      %s269 = sadd.s32 %s267, %s268
      %s270 = smul.addr %s269, 8
      %s271 = scalar_lea.vmem %s5, %s270
      %s272 = smul.u32 %s23, 2
      %s273 = sadd.s32 %s272, %s24
      %p274 = scmp.lt.s32.totalorder %s22, 1
      %s275 = scalar_select %p274, %s22, 1
      %p276 = scmp.lt.s32.totalorder %s273, 1
      %s277 = scalar_select %p276, %s273, 1
      %s278 = smul.addr %s275, 2
      %s279 = sadd.s32 %s277, %s278
      %s280 = smul.addr %s279, 2
      %s281 = scalar_lea.vmem %s0, %s280
      %s282 = smul.u32 %s23, 2
      %s283 = sadd.s32 %s282, %s24
      %p284 = scmp.lt.s32.totalorder %s22, 1
      %s285 = scalar_select %p284, %s22, 1
      %p286 = scmp.lt.s32.totalorder %s23, 0
      %s287 = scalar_select %p286, %s23, 0
      %s288 = smul.addr %s287, 2
      %s289 = smul.addr %s285, 2
      %s290 = sadd.s32 %s288, %s289
      %s291 = smul.addr %s290, 8
      %s292 = scalar_lea.vmem %s4, %s291
      %p293 = scmp.lt.s32.totalorder %s22, 1
      %s294 = scalar_select %p293, %s22, 1
      %p295 = scmp.lt.s32.totalorder %s23, 0
      %s296 = scalar_select %p295, %s23, 0
      %s297 = smul.addr %s296, 2
      %s298 = smul.addr %s294, 2
      %s299 = sadd.s32 %s297, %s298
      %s300 = smul.addr %s299, 8
      %s301 = scalar_lea.vmem %s5, %s300
      %p302 = scmp.eq.s32.totalorder %s24, 0
      // Predicated region
      $region37: #{pixel_discriminator.2} parent=35 // pred_check
        %p303 = pneg %p302
      $region38: #{pixel_discriminator.2} parent=35 // pred_check_branch
        %305 = sbr.rel (%p303) target = $region40
      $region39: #{pixel_discriminator.2} parent=35 // pred_region
        %vm306 = vcmask 7168
        %307 = vst.msk [vmem:[%s292] sm:$0xff] %vm306, 0.0
        %308 = vst.msk [vmem:[%s292 + $0x8] sm:$0xff] %vm306, 0.0
        %309 = vst.msk [vmem:[%s301] sm:$0xff] %vm306, 0.0
        %310 = vst.msk [vmem:[%s301 + $0x8] sm:$0xff] %vm306, 0.0
      $region40: #{pixel_discriminator.2} parent=35 // pred_fallthru
        _
      %v311 = vld [vmem:[%s281] sm:$0x3]
      %v312 = vld [vmem:[%s1] sm:$0xff]
      %v313 = vld [vmem:[%s2] sm:$0xff]
      %v314 = vld [vmem:[%s3] sm:$0xff]
      %v315 = vld [vmem:[%s3 + $0x8] sm:$0xff]
      %v316 = vunpack.c.l.bf16 %v311
      %318 = vset.pattern.permute.xlu0 0
      %319 = vperm.xlu0 %318, %v313
      %v320 = vpop.permute.xlu0 %319
      %vm322 = vcmask 31744
      %v324 = vsel %vm322, %v312, 0
      %vm326 = vcmask 1043456
      %v328 = vsel %vm326, %v316, 0
      %330 = vmatprep.subr.mxu0 0.0
      %331 = vmatpush1.msra.mxu0 %v328
      %332 = vmatprep.subr.mxu0 0.0
      %333 = vmatpush1.msra.mxu0 0.0
      %334 = vmatprep.subr.mxu0 0.0
      %335 = vmatpush1.msra.mxu0 0.0
      %336 = vmatprep.subr.mxu0 0.0
      %337 = vmatpush1.msra.mxu0 0.0
      %338 = vmatprep.subr.mxu0 0.0
      %339 = vmatpush1.msra.mxu0 0.0
      %340 = vmatprep.subr.mxu0 0.0
      %341 = vmatpush1.msra.mxu0 0.0
      %342 = vmatprep.subr.mxu0 0.0
      %343 = vmatpush1.msra.mxu0 0.0
      %344 = vmatprep.subr.mxu0 0.0
      %345 = vmatpush1.msra.mxu0 0.0
      %346 = vmatprep.subr.mxu0 0.0
      %347 = vmatpush1.msra.mxu0 0.0
      %348 = vmatprep.subr.mxu0 0.0
      %349 = vmatpush1.msra.mxu0 0.0
      %350 = vmatprep.subr.mxu0 0.0
      %351 = vmatpush1.msra.mxu0 0.0
      %352 = vmatprep.subr.mxu0 0.0
      %353 = vmatpush1.msra.mxu0 0.0
      %354 = vmatprep.subr.mxu0 0.0
      %355 = vmatpush1.msra.mxu0 0.0
      %356 = vmatprep.subr.mxu0 0.0
      %357 = vmatpush1.msra.mxu0 0.0
      %358 = vmatprep.subr.mxu0 0.0
      %359 = vmatpush1.msra.mxu0 0.0
      %360 = vmatprep.subr.mxu0 0.0
      %361 = vmatpush1.msra.mxu0 0.0
      %362 = vmatprep.subr.mxu0 0.0
      %363 = vmatpush1.msra.mxu0 0.0
      %364 = vmatprep.subr.mxu0 0.0
      %365 = vmatpush1.msra.mxu0 0.0
      %366 = vmatprep.subr.mxu0 0.0
      %367 = vmatpush1.msra.mxu0 0.0
      %368 = vmatprep.subr.mxu0 0.0
      %369 = vmatpush1.msra.mxu0 0.0
      %370 = vmatprep.subr.mxu0 0.0
      %371 = vmatpush1.msra.mxu0 0.0
      %372 = vmatprep.subr.mxu0 0.0
      %373 = vmatpush1.msra.mxu0 0.0
      %374 = vmatprep.subr.mxu0 0.0
      %375 = vmatpush1.msra.mxu0 0.0
      %376 = vmatprep.subr.mxu0 0.0
      %377 = vmatpush1.msra.mxu0 0.0
      %378 = vmatprep.subr.mxu0 0.0
      %379 = vmatpush1.msra.mxu0 0.0
      %380 = vmatprep.subr.mxu0 0.0
      %381 = vmatpush1.msra.mxu0 0.0
      %382 = vmatprep.subr.mxu0 0.0
      %383 = vmatpush1.msra.mxu0 0.0
      %384 = vmatprep.subr.mxu0 0.0
      %385 = vmatpush1.msra.mxu0 0.0
      %386 = vmatprep.subr.mxu0 0.0
      %387 = vmatpush1.msra.mxu0 0.0
      %388 = vmatprep.subr.mxu0 0.0
      %389 = vmatpush1.msra.mxu0 0.0
      %390 = vmatprep.subr.mxu0 0.0
      %391 = vmatpush1.msra.mxu0 0.0
      %392 = vmatprep.subr.mxu0 0.0
      %393 = vmatpush1.msra.mxu0 0.0
      %394 = vmatprep.mubr.f32.mxu0 0.0
      %395 = vmatmul.mubr.f32.gmra.mrb[0].mxu0 %v324
      %v396 = vpop.f32.mrb[0].mxu0
      %v397 = vadd.f32 %v320, %v396
      %v398 = vpop.f32.mrb[0].mxu0
      %399 = vdwg.mxu0
      %vm400 = vcmp.ge.f32.partialorder %v397, 0.0
      %v401 = vmul.f32 %v397, 0.2
      %v402 = vsel %vm400, %v397, %v401
      %vm403 = vcmask 64512
      %v405 = vsel %vm403, %v314, 0
      %v408 = vsel %vm403, %v315, 0
      %410 = vmatprep.subr.mxu0 0.0
      %411 = vmatpush1.msra.mxu0 %v402
      %412 = vmatprep.subr.mxu0 0.0
      %413 = vmatpush1.msra.mxu0 0.0
      %414 = vmatprep.subr.mxu0 0.0
      %415 = vmatpush1.msra.mxu0 0.0
      %416 = vmatprep.subr.mxu0 0.0
      %417 = vmatpush1.msra.mxu0 0.0
      %418 = vmatprep.subr.mxu0 0.0
      %419 = vmatpush1.msra.mxu0 0.0
      %420 = vmatprep.subr.mxu0 0.0
      %421 = vmatpush1.msra.mxu0 0.0
      %422 = vmatprep.subr.mxu0 0.0
      %423 = vmatpush1.msra.mxu0 0.0
      %424 = vmatprep.subr.mxu0 0.0
      %425 = vmatpush1.msra.mxu0 0.0
      %426 = vmatprep.subr.mxu0 0.0
      %427 = vmatpush1.msra.mxu0 0.0
      %428 = vmatprep.subr.mxu0 0.0
      %429 = vmatpush1.msra.mxu0 0.0
      %430 = vmatprep.subr.mxu0 0.0
      %431 = vmatpush1.msra.mxu0 0.0
      %432 = vmatprep.subr.mxu0 0.0
      %433 = vmatpush1.msra.mxu0 0.0
      %434 = vmatprep.subr.mxu0 0.0
      %435 = vmatpush1.msra.mxu0 0.0
      %436 = vmatprep.subr.mxu0 0.0
      %437 = vmatpush1.msra.mxu0 0.0
      %438 = vmatprep.subr.mxu0 0.0
      %439 = vmatpush1.msra.mxu0 0.0
      %440 = vmatprep.subr.mxu0 0.0
      %441 = vmatpush1.msra.mxu0 0.0
      %442 = vmatprep.subr.mxu0 0.0
      %443 = vmatpush1.msra.mxu0 0.0
      %444 = vmatprep.subr.mxu0 0.0
      %445 = vmatpush1.msra.mxu0 0.0
      %446 = vmatprep.subr.mxu0 0.0
      %447 = vmatpush1.msra.mxu0 0.0
      %448 = vmatprep.subr.mxu0 0.0
      %449 = vmatpush1.msra.mxu0 0.0
      %450 = vmatprep.subr.mxu0 0.0
      %451 = vmatpush1.msra.mxu0 0.0
      %452 = vmatprep.subr.mxu0 0.0
      %453 = vmatpush1.msra.mxu0 0.0
      %454 = vmatprep.subr.mxu0 0.0
      %455 = vmatpush1.msra.mxu0 0.0
      %456 = vmatprep.subr.mxu0 0.0
      %457 = vmatpush1.msra.mxu0 0.0
      %458 = vmatprep.subr.mxu0 0.0
      %459 = vmatpush1.msra.mxu0 0.0
      %460 = vmatprep.subr.mxu0 0.0
      %461 = vmatpush1.msra.mxu0 0.0
      %462 = vmatprep.subr.mxu0 0.0
      %463 = vmatpush1.msra.mxu0 0.0
      %464 = vmatprep.subr.mxu0 0.0
      %465 = vmatpush1.msra.mxu0 0.0
      %466 = vmatprep.subr.mxu0 0.0
      %467 = vmatpush1.msra.mxu0 0.0
      %468 = vmatprep.subr.mxu0 0.0
      %469 = vmatpush1.msra.mxu0 0.0
      %470 = vmatprep.subr.mxu0 0.0
      %471 = vmatpush1.msra.mxu0 0.0
      %472 = vmatprep.subr.mxu0 0.0
      %473 = vmatpush1.msra.mxu0 0.0
      %474 = vmatprep.mubr.f32.mxu0 0.0
      %475 = vmatmul.mubr.f32.gmra.mrb[0].mxu0 %v405
      %v476 = vpop.f32.mrb[0].mxu0
      %v477 = vadd.f32 0.0, %v476
      %v478 = vpop.f32.mrb[0].mxu0
      %479 = vmatprep.mubr.f32.mxu0 0.0
      %480 = vmatmul.mubr.f32.gmra.mrb[0].mxu0 %v408
      %v481 = vpop.f32.mrb[0].mxu0
      %v482 = vadd.f32 0.0, %v481
      %v483 = vpop.f32.mrb[0].mxu0
      %484 = vdwg.mxu0
      %v485 = vld [vmem:[%s292] sm:$0xff]
      %v486 = vld [vmem:[%s292 + $0x8] sm:$0xff]
      %487 = vadd.xlane.f32.xlu0 %v477
      %v488 = vpop.xlane.xlu0 %487
      %489 = vadd.xlane.f32.xlu0 %v482
      %v490 = vpop.xlane.xlu0 %489
      %v491 = vadd.f32 %v485, %v488
      %v492 = vadd.f32 %v486, %v490
      %vm493 = vcmask 7168
      %494 = vst.msk [vmem:[%s292] sm:$0xff] %vm493, %v491
      %495 = vst.msk [vmem:[%s292 + $0x8] sm:$0xff] %vm493, %v492
      %v496 = vld [vmem:[%s301] sm:$0xff]
      %v497 = vld [vmem:[%s301 + $0x8] sm:$0xff]
      %v498 = vmul.f32 %v477, %v477
      %v499 = vmul.f32 %v482, %v482
      %500 = vadd.xlane.f32.xlu0 %v498
      %v501 = vpop.xlane.xlu0 %500
      %502 = vadd.xlane.f32.xlu0 %v499
      %v503 = vpop.xlane.xlu0 %502
      %v504 = vadd.f32 %v496, %v501
      %v505 = vadd.f32 %v497, %v503
      %506 = vst.msk [vmem:[%s301] sm:$0xff] %vm493, %v504
      %507 = vst.msk [vmem:[%s301 + $0x8] sm:$0xff] %vm493, %v505
      %p508 = scmp.lt.s32.totalorder %s22, 1
      %s509 = scalar_select %p508, %s22, 1
      %p510 = scmp.lt.s32.totalorder %s23, 0
      %s511 = scalar_select %p510, %s23, 0
      %s512 = smul.addr %s511, 2
      %s513 = smul.addr %s509, 2
      %s514 = sadd.s32 %s512, %s513
      %s515 = smul.addr %s514, 8
      %s516 = scalar_lea.vmem %s4, %s515
      %p517 = scmp.lt.s32.totalorder %s22, 1
      %s518 = scalar_select %p517, %s22, 1
      %p519 = scmp.lt.s32.totalorder %s23, 0
      %s520 = scalar_select %p519, %s23, 0
      %s521 = smul.addr %s520, 2
      %s522 = smul.addr %s518, 2
      %s523 = sadd.s32 %s521, %s522
      %s524 = smul.addr %s523, 8
      %s525 = scalar_lea.vmem %s5, %s524
      // Predicated region
      $region41: #{pixel_discriminator.2} parent=35 // pred_check
        %p526 = pneg %p151
      $region42: #{pixel_discriminator.2} parent=35 // pred_check_branch
        %528 = sbr.rel (%p526) target = $region44
      $region43: #{pixel_discriminator.2} parent=35 // pred_region
        _
      $region44: #{pixel_discriminator.2} parent=35 // pred_fallthru
        _
      // Predicated region
      $region45: #{pixel_discriminator.2} parent=35 // pred_check
        %p529 = pneg %p179
      $region46: #{pixel_discriminator.2} parent=35 // pred_check_branch
        %531 = sbr.rel (%p529) target = $region48
      $region47: #{pixel_discriminator.2} parent=35 // pred_region
        _
      $region48: #{pixel_discriminator.2} parent=35 // pred_fallthru
        _
    $region36: #{pixel_discriminator.2} parent=5 // pred_fallthru
      _
    %p532 = scmp.le.s32.totalorder 2, %s12
    // Predicated region
    $region49: #{pixel_discriminator.2} parent=5 // pred_check
      %p533 = pneg %p532
    $region50: #{pixel_discriminator.2} parent=5 // pred_check_branch
      %535 = sbr.rel (%p533) target = $region52
    $region51: #{pixel_discriminator.2} parent=5 // pred_region
      %s536 = ssub.s32 %s12, 2
      // Predicated region
      $region53: #{pixel_discriminator.2} parent=51 // pred_check
        %p537 = pneg %p157
      $region54: #{pixel_discriminator.2} parent=51 // pred_check_branch
        %539 = sbr.rel (%p537) target = $region56
      $region55: #{pixel_discriminator.2} parent=51 // pred_region
        %p540 = scmp.lt.s32.totalorder %s25, 1
        %s541 = scalar_select %p540, %s25, 1
        %p542 = scmp.lt.s32.totalorder %s26, 0
        %s543 = scalar_select %p542, %s26, 0
        %s544 = smul.addr %s543, 2
        %s545 = smul.addr %s541, 2
        %s546 = sadd.s32 %s544, %s545
        %s547 = smul.addr %s546, 8
        %s548 = scalar_lea.vmem %s4, %s547
      $region56: #{pixel_discriminator.2} parent=51 // pred_fallthru
        _
      // Predicated region
      $region57: #{pixel_discriminator.2} parent=51 // pred_check
        %p549 = pneg %p185
      $region58: #{pixel_discriminator.2} parent=51 // pred_check_branch
        %551 = sbr.rel (%p549) target = $region60
      $region59: #{pixel_discriminator.2} parent=51 // pred_region
        %p552 = scmp.lt.s32.totalorder %s25, 1
        %s553 = scalar_select %p552, %s25, 1
        %p554 = scmp.lt.s32.totalorder %s26, 0
        %s555 = scalar_select %p554, %s26, 0
        %s556 = smul.addr %s555, 2
        %s557 = smul.addr %s553, 2
        %s558 = sadd.s32 %s556, %s557
        %s559 = smul.addr %s558, 8
        %s560 = scalar_lea.vmem %s5, %s559
      $region60: #{pixel_discriminator.2} parent=51 // pred_fallthru
        _
    $region52: #{pixel_discriminator.2} parent=5 // pred_fallthru
      _
  $region6: #{pixel_discriminator.2} parent=0 // loop_footer
    %s16 = sadd.s32 1, %s12
  $region7: #{pixel_discriminator.2} parent=0 // loop_footer_branch
    %11 = sbr.rel target = $region3
  $region8: #{pixel_discriminator.2} parent=0 // loop_exit
    _

</llo_original>
